<compile_context>
chip_gen: v7x
topology: tpu7x:2x2x1
jax: 0.10.0
libtpu: 0.0.40
codegen_flags: <defaults>
</compile_context>

<pallas_src>
import jax
import jax.numpy as jnp
from jax.experimental import pallas as pl
from jax.experimental.pallas import tpu as pltpu


# ----------------------------------------------------------------------------
# helpers
# ----------------------------------------------------------------------------
def _round_up(n, m):
    return ((n + m - 1) // m) * m


def _vmem_bytes_2d(rows, cols, dtype):
    """Conservative padded VMEM footprint of one 2-D buffer ((8,128) tiling)."""
    return (_round_up(max(int(rows), 1), 8)
            * _round_up(max(int(cols), 1), 128)
            * jnp.dtype(dtype).itemsize)


def _choose_tile_b(B, act_bytes_fn, act_budget, max_tile=1024):
    """Largest batch tile that fits the activation budget; prefer even grids."""
    if B <= 8 or B % 8 != 0:
        # TODO(synk): masked remainder tile for B not a multiple of 8.
        return B
    cands = [t for t in range(8, min(B, max_tile) + 1, 8)
             if B % t == 0 and act_bytes_fn(t) <= act_budget]
    if not cands:
        return 8
    # Even grid length >= 2 lets v7x shard the "parallel" axis over both TCs.
    even = [t for t in cands if (B // t) % 2 == 0]
    return max(even) if even else max(cands)


# ----------------------------------------------------------------------------
# kernel
# ----------------------------------------------------------------------------
def _kd_kernel(x_ref, x0_ref, y0_ref,
               we_ref, be_ref, wr_ref, br_ref, w_ref,
               o_ref):
    hp = we_ref.shape[1]          # padded hidden width (split point of Wr)
    cdt = we_ref.dtype            # matmul compute dtype (bf16 or f32)

    def enc(a_ref):
        # (tb, din) @ (din, HP) -> (tb, HP), f32 accumulate, f32 epilogue.
        h = jnp.dot(a_ref[...].astype(cdt), we_ref[...],
                    preferred_element_type=jnp.float32)
        h = h + be_ref[...]                     # (tb, HP) + (1, HP)
        return jnp.where(h > 0, h, 0.01 * h)    # LeakyReLU(0.01)

    e0 = enc(x_ref).astype(cdt)                 # enc(x)
    e1 = enc(x0_ref).astype(cdt)                # enc(x0)

    # res(cat(e0, e1)) = e0 @ Wr[:HP] + e1 @ Wr[HP:] + br
    # (static views of the resident Wr block; HP is a sublane multiple)
    wr_top = wr_ref[pl.ds(0, hp), :]
    wr_bot = wr_ref[pl.ds(hp, hp), :]
    res = (jnp.dot(e0, wr_top, preferred_element_type=jnp.float32)
           + jnp.dot(e1, wr_bot, preferred_element_type=jnp.float32)
           + br_ref[...])

    # y0 @ W
    yw = jnp.dot(y0_ref[...].astype(cdt), w_ref[...],
                 preferred_element_type=jnp.float32)

    o_ref[...] = (yw + res).astype(o_ref.dtype)


# ----------------------------------------------------------------------------
# parameter prep (pad hid/dout to lane multiples, cast matmul weights)
# ----------------------------------------------------------------------------
def prepare_kd_params(params, compute_dtype=jnp.bfloat16):
    """Zero padding is semantics-preserving (padded rows/cols contribute 0)."""
    We, be, Wr, br, W = (params[k] for k in ("We", "be", "Wr", "br", "W"))
    din, hid = We.shape
    dout = W.shape[0]
    HP = _round_up(hid, 128)
    DP = _round_up(dout, 128)

    We_p = jnp.zeros((din, HP), compute_dtype).at[:, :hid].set(We.astype(compute_dtype))
    be_p = jnp.zeros((1, HP), jnp.float32).at[:, :hid].set(be.astype(jnp.float32))
    Wr_p = jnp.zeros((2 * HP, DP), compute_dtype)
    Wr_p = Wr_p.at[:hid, :dout].set(Wr[:hid, :].astype(compute_dtype))
    Wr_p = Wr_p.at[HP:HP + hid, :dout].set(Wr[hid:, :].astype(compute_dtype))
    br_p = jnp.zeros((1, DP), jnp.float32).at[:, :dout].set(br.astype(jnp.float32))
    W_p = jnp.zeros((dout, DP), compute_dtype).at[:, :dout].set(W.astype(compute_dtype))
    return {"We": We_p, "be": be_p, "Wr": Wr_p, "br": br_p, "W": W_p}


# ----------------------------------------------------------------------------
# forward wrapper
# ----------------------------------------------------------------------------
def kd_forward(x, x0, y0, prep, *, tile_b=None,
               target_vmem_bytes=40 * 1024 * 1024):
    """x, x0: (B, din); y0: (B, dout).

    Returns the lane-padded (B, DP) f32 output; slice [:, :dout] at the use
    site (keeps the in-kernel store unmasked and avoids an extra HBM pass).
    If the producer can emit bf16 activations they are accepted as-is (the
    in-kernel .astype becomes a no-op); do not add a standalone wrapper cast.
    """
    B, din = x.shape
    dy = y0.shape[1]
    HP = prep["We"].shape[1]        # padded hidden width
    DP = prep["W"].shape[1]         # padded output width

    weights = (prep["We"], prep["be"], prep["Wr"], prep["br"], prep["W"])
    weight_bytes = sum(_vmem_bytes_2d(a.shape[0], a.shape[1], a.dtype)
                       for a in weights)
    # TODO(synk): switch to a K/N-tiled variant with a VMEM f32 accumulator
    # once the resident weights (mainly Wr = 2*HP*DP) approach ~20-30 MiB.

    def act_bytes(tb):  # double-buffered activation + output tiles
        return 2 * (_vmem_bytes_2d(tb, din, x.dtype)
                    + _vmem_bytes_2d(tb, din, x0.dtype)
                    + _vmem_bytes_2d(tb, dy, y0.dtype)
                    + _vmem_bytes_2d(tb, DP, jnp.float32))

    if tile_b is None:
        act_budget = max(4 * 1024 * 1024, target_vmem_bytes - 2 * weight_bytes)
        tile_b = _choose_tile_b(B, act_bytes, act_budget)
    assert B % tile_b == 0 and (tile_b % 8 == 0 or tile_b == B), \
        "tile_b must divide B and be a sublane multiple (or the full batch)"
    grid = (B // tile_b,)

    # VMEM limit from the real footprint (worst case: double-buffered weights),
    # with headroom; clamped to stay inside v7x's 64 MiB per-TC VMEM.
    footprint = 2 * weight_bytes + act_bytes(tile_b)
    vmem_limit = min(64 * 1024 * 1024,
                     max(16 * 1024 * 1024,
                         _round_up(int(1.5 * footprint) + 2 * 1024 * 1024,
                                   1024 * 1024)))

    cdt_bytes = jnp.dtype(prep["W"].dtype).itemsize
    flops = (2 * 2 * B * din * HP         # two enc matmuls (x and x0)
             + 2 * 2 * B * HP * DP        # two res matmuls
             + 2 * B * dy * DP)           # y0 @ W
    bytes_accessed = (
        (x.size * x.dtype.itemsize + x0.size * x0.dtype.itemsize
         + y0.size * y0.dtype.itemsize)
        + (prep["We"].size + prep["Wr"].size + prep["W"].size) * cdt_bytes
        + (prep["be"].size + prep["br"].size) * 4
        + B * DP * 4)

    def build(single_buffer_weights):
        w_kwargs = ({"pipeline_mode": pl.Buffered(1)}
                    if single_buffer_weights else {})

        def act_spec(feat):
            return pl.BlockSpec((tile_b, feat), lambda i: (i, 0))

        def weight_spec(arr):
            # Constant index_map -> block stays VMEM-resident across the grid.
            return pl.BlockSpec(arr.shape, lambda i: (0, 0), **w_kwargs)

        return pl.pallas_call(
            _kd_kernel,
            out_shape=jax.ShapeDtypeStruct((B, DP), jnp.float32),
            grid_spec=pltpu.PrefetchScalarGridSpec(
                num_scalar_prefetch=0,
                grid=grid,
                in_specs=[act_spec(din), act_spec(din), act_spec(dy)]
                         + [weight_spec(a) for a in weights],
                out_specs=pl.BlockSpec((tile_b, DP), lambda i: (i, 0)),
            ),
            compiler_params=pltpu.CompilerParams(
                dimension_semantics=("parallel",),
                vmem_limit_bytes=int(vmem_limit),
            ),
            cost_estimate=pl.CostEstimate(flops=int(flops), transcendentals=0,
                                          bytes_accessed=int(bytes_accessed)),
        )

    args = (x, x0, y0) + weights
    try:
        # Preferred: single-buffered resident weights (halves weight VMEM).
        out_padded = build(single_buffer_weights=True)(*args)
    except Exception:
        # Fallback if this JAX/Mosaic build rejects Buffered(1) on pallas_call.
        out_padded = build(single_buffer_weights=False)(*args)

    return out_padded


# ----------------------------------------------------------------------------
# pure-JAX reference + param init
# ----------------------------------------------------------------------------
def kd_reference(x, x0, y0, params):
    def enc(inp):
        h = inp @ params["We"] + params["be"]
        return jnp.where(h > 0, h, 0.01 * h)
    res = jnp.concatenate([enc(x), enc(x0)], axis=-1) @ params["Wr"] + params["br"]
    return y0 @ params["W"] + res


def init_params(key, din, hid, dout):
    ks = jax.random.split(key, 5)
    We = jax.random.normal(ks[0], (din, hid), jnp.float32) * 0.1       # enc weight^T
    be = jax.random.normal(ks[1], (1, hid), jnp.float32) * 0.1         # enc bias
    Wr = jax.random.normal(ks[2], (2 * hid, dout), jnp.float32) * 0.1  # res weight^T
    br = jax.random.normal(ks[3], (1, dout), jnp.float32) * 0.1        # res bias
    W = jax.random.uniform(ks[4], (dout, dout), jnp.float32)           # torch.rand
    return {"We": We, "be": be, "Wr": Wr, "br": br, "W": W}


if __name__ == "__main__":
    B, din, hid, dout = 64, 32, 64, 32   # auto-chosen tile_b=32 -> grid=(2,)

    key = jax.random.PRNGKey(0)
    kx, kx0, ky0, kp = jax.random.split(key, 4)
    x = jax.random.normal(kx, (B, din), jnp.float32)
    x0 = jax.random.normal(kx0, (B, din), jnp.float32)
    y0 = jax.random.normal(ky0, (B, dout), jnp.float32)
    params = init_params(kp, din, hid, dout)

    ref = kd_reference(x, x0, y0, params)

    # f32-operand path: structural-exactness check (tight tolerance).
    prep_f32 = prepare_kd_params(params, compute_dtype=jnp.float32)
    out_f32 = jax.block_until_ready(kd_forward(x, x0, y0, prep_f32))
    DP = prep_f32["W"].shape[1]
    assert out_f32.shape == (B, DP)
    assert jnp.allclose(out_f32[:, :dout], ref, atol=1e-3, rtol=1e-3)
    assert jnp.allclose(out_f32[:, dout:], 0.0, atol=1e-5)   # padded lanes are 0

    # bf16-operand / f32-accumulate path: fast MXU path (looser tolerance).
    prep_bf16 = prepare_kd_params(params, compute_dtype=jnp.bfloat16)
    out_bf16 = jax.block_until_ready(kd_forward(x, x0, y0, prep_bf16))
    assert out_bf16.shape == (B, DP)
    assert jnp.allclose(out_bf16[:, :dout], ref, atol=5e-2, rtol=5e-2)

    print("KERNEL_OK")
</pallas_src>

<mosaic_0001>
module attributes {stable_mosaic.version = 11 : i64} {
  func.func @_kd_kernel(%arg0: i32, %arg1: memref<32x32xf32, #tpu.memory_space<vmem>>, %arg2: memref<32x32xf32, #tpu.memory_space<vmem>>, %arg3: memref<32x32xf32, #tpu.memory_space<vmem>>, %arg4: memref<32x128xf32, #tpu.memory_space<vmem>>, %arg5: memref<1x128xf32, #tpu.memory_space<vmem>>, %arg6: memref<256x128xf32, #tpu.memory_space<vmem>>, %arg7: memref<1x128xf32, #tpu.memory_space<vmem>>, %arg8: memref<32x128xf32, #tpu.memory_space<vmem>>, %arg9: memref<32x128xf32, #tpu.memory_space<vmem>>) attributes {dimension_semantics = [#tpu.dimension_semantics<parallel>], iteration_bounds = array<i64: 2>, scalar_prefetch = 0 : i64, scratch_operands = 0 : i64, tpu.core_type = #tpu.core_type<tc>, window_params = [{transform_indices = @transform_0, window_bounds = array<i64: 32, 32>}, {transform_indices = @transform_1, window_bounds = array<i64: 32, 32>}, {transform_indices = @transform_2, window_bounds = array<i64: 32, 32>}, {pipeline_mode = #tpu.pipeline_mode<synchronous>, transform_indices = @transform_3, window_bounds = array<i64: 32, 128>}, {pipeline_mode = #tpu.pipeline_mode<synchronous>, transform_indices = @transform_4, window_bounds = array<i64: 1, 128>}, {pipeline_mode = #tpu.pipeline_mode<synchronous>, transform_indices = @transform_5, window_bounds = array<i64: 256, 128>}, {pipeline_mode = #tpu.pipeline_mode<synchronous>, transform_indices = @transform_6, window_bounds = array<i64: 1, 128>}, {pipeline_mode = #tpu.pipeline_mode<synchronous>, transform_indices = @transform_7, window_bounds = array<i64: 32, 128>}, {transform_indices = @transform_8, window_bounds = array<i64: 32, 128>}]} {
    %c0 = arith.constant 0 : index
    %c0_0 = arith.constant 0 : index
    %0 = vector.load %arg1[%c0, %c0_0] : memref<32x32xf32, #tpu.memory_space<vmem>>, vector<32x32xf32>
    %c0_1 = arith.constant 0 : index
    %c0_2 = arith.constant 0 : index
    %1 = vector.load %arg4[%c0_1, %c0_2] : memref<32x128xf32, #tpu.memory_space<vmem>>, vector<32x128xf32>
    %cst = arith.constant dense<0.000000e+00> : vector<32x128xf32>
    %2 = tpu.matmul %0, %1, %cst {dimension_numbers = #tpu.dot_dimension_numbers<[1], [0], [0], [1], [0, 0, 1, 1], [], []>} : vector<32x32xf32>, vector<32x128xf32>, vector<32x128xf32> -> vector<32x128xf32>
    %c0_3 = arith.constant 0 : index
    %c0_4 = arith.constant 0 : index
    %3 = vector.load %arg5[%c0_3, %c0_4] : memref<1x128xf32, #tpu.memory_space<vmem>>, vector<1x128xf32>
    %4 = vector.broadcast %3 : vector<1x128xf32> to vector<32x128xf32>
    %5 = arith.addf %2, %4 : vector<32x128xf32>
    %cst_5 = arith.constant 0.000000e+00 : f32
    %6 = vector.broadcast %cst_5 : f32 to vector<32x128xf32>
    %7 = arith.cmpf ogt, %5, %6 : vector<32x128xf32>
    %cst_6 = arith.constant 0.00999999977 : f32
    %8 = vector.broadcast %cst_6 : f32 to vector<32x128xf32>
    %9 = arith.mulf %8, %5 : vector<32x128xf32>
    %10 = arith.select %7, %5, %9 : vector<32x128xi1>, vector<32x128xf32>
    %c0_7 = arith.constant 0 : index
    %c0_8 = arith.constant 0 : index
    %11 = vector.load %arg2[%c0_7, %c0_8] : memref<32x32xf32, #tpu.memory_space<vmem>>, vector<32x32xf32>
    %c0_9 = arith.constant 0 : index
    %c0_10 = arith.constant 0 : index
    %12 = vector.load %arg4[%c0_9, %c0_10] : memref<32x128xf32, #tpu.memory_space<vmem>>, vector<32x128xf32>
    %cst_11 = arith.constant dense<0.000000e+00> : vector<32x128xf32>
    %13 = tpu.matmul %11, %12, %cst_11 {dimension_numbers = #tpu.dot_dimension_numbers<[1], [0], [0], [1], [0, 0, 1, 1], [], []>} : vector<32x32xf32>, vector<32x128xf32>, vector<32x128xf32> -> vector<32x128xf32>
    %c0_12 = arith.constant 0 : index
    %c0_13 = arith.constant 0 : index
    %14 = vector.load %arg5[%c0_12, %c0_13] : memref<1x128xf32, #tpu.memory_space<vmem>>, vector<1x128xf32>
    %15 = vector.broadcast %14 : vector<1x128xf32> to vector<32x128xf32>
    %16 = arith.addf %13, %15 : vector<32x128xf32>
    %cst_14 = arith.constant 0.000000e+00 : f32
    %17 = vector.broadcast %cst_14 : f32 to vector<32x128xf32>
    %18 = arith.cmpf ogt, %16, %17 : vector<32x128xf32>
    %cst_15 = arith.constant 0.00999999977 : f32
    %19 = vector.broadcast %cst_15 : f32 to vector<32x128xf32>
    %20 = arith.mulf %19, %16 : vector<32x128xf32>
    %21 = arith.select %18, %16, %20 : vector<32x128xi1>, vector<32x128xf32>
    %c0_16 = arith.constant 0 : index
    %c0_17 = arith.constant 0 : index
    %22 = vector.load %arg6[%c0_16, %c0_17] : memref<256x128xf32, #tpu.memory_space<vmem>>, vector<128x128xf32>
    %c128 = arith.constant 128 : index
    %c0_18 = arith.constant 0 : index
    %23 = vector.load %arg6[%c128, %c0_18] : memref<256x128xf32, #tpu.memory_space<vmem>>, vector<128x128xf32>
    %cst_19 = arith.constant dense<0.000000e+00> : vector<32x128xf32>
    %24 = tpu.matmul %10, %22, %cst_19 {dimension_numbers = #tpu.dot_dimension_numbers<[1], [0], [0], [1], [0, 0, 1, 1], [], []>} : vector<32x128xf32>, vector<128x128xf32>, vector<32x128xf32> -> vector<32x128xf32>
    %cst_20 = arith.constant dense<0.000000e+00> : vector<32x128xf32>
    %25 = tpu.matmul %21, %23, %cst_20 {dimension_numbers = #tpu.dot_dimension_numbers<[1], [0], [0], [1], [0, 0, 1, 1], [], []>} : vector<32x128xf32>, vector<128x128xf32>, vector<32x128xf32> -> vector<32x128xf32>
    %26 = arith.addf %24, %25 : vector<32x128xf32>
    %c0_21 = arith.constant 0 : index
    %c0_22 = arith.constant 0 : index
    %27 = vector.load %arg7[%c0_21, %c0_22] : memref<1x128xf32, #tpu.memory_space<vmem>>, vector<1x128xf32>
    %28 = vector.broadcast %27 : vector<1x128xf32> to vector<32x128xf32>
    %29 = arith.addf %26, %28 : vector<32x128xf32>
    %c0_23 = arith.constant 0 : index
    %c0_24 = arith.constant 0 : index
    %30 = vector.load %arg3[%c0_23, %c0_24] : memref<32x32xf32, #tpu.memory_space<vmem>>, vector<32x32xf32>
    %c0_25 = arith.constant 0 : index
    %c0_26 = arith.constant 0 : index
    %31 = vector.load %arg8[%c0_25, %c0_26] : memref<32x128xf32, #tpu.memory_space<vmem>>, vector<32x128xf32>
    %cst_27 = arith.constant dense<0.000000e+00> : vector<32x128xf32>
    %32 = tpu.matmul %30, %31, %cst_27 {dimension_numbers = #tpu.dot_dimension_numbers<[1], [0], [0], [1], [0, 0, 1, 1], [], []>} : vector<32x32xf32>, vector<32x128xf32>, vector<32x128xf32> -> vector<32x128xf32>
    %33 = arith.addf %32, %29 : vector<32x128xf32>
    %c0_28 = arith.constant 0 : index
    %c0_29 = arith.constant 0 : index
    %34 = vector.load %arg9[%c0_28, %c0_29] : memref<32x128xf32, #tpu.memory_space<vmem>>, vector<32x128xf32>
    tpu.vector_store %arg9[%c0_28, %c0_29], %33 {strides = array<i32>} : memref<32x128xf32, #tpu.memory_space<vmem>>, vector<32x128xf32>,
    return
  }
  func.func @transform_0(%arg0: i32) -> (i32, i32) {
    %c0_i32 = arith.constant 0 : i32
    %c0_i32_0 = arith.constant 0 : i32
    return %arg0, %c0_i32 : i32, i32
  }
  func.func @transform_1(%arg0: i32) -> (i32, i32) {
    %c0_i32 = arith.constant 0 : i32
    %c0_i32_0 = arith.constant 0 : i32
    return %arg0, %c0_i32 : i32, i32
  }
  func.func @transform_2(%arg0: i32) -> (i32, i32) {
    %c0_i32 = arith.constant 0 : i32
    %c0_i32_0 = arith.constant 0 : i32
    return %arg0, %c0_i32 : i32, i32
  }
  func.func @transform_3(%arg0: i32) -> (i32, i32) {
    %c0_i32 = arith.constant 0 : i32
    %c0_i32_0 = arith.constant 0 : i32
    %c0_i32_1 = arith.constant 0 : i32
    return %c0_i32, %c0_i32_0 : i32, i32
  }
  func.func @transform_4(%arg0: i32) -> (i32, i32) {
    %c0_i32 = arith.constant 0 : i32
    %c0_i32_0 = arith.constant 0 : i32
    %c0_i32_1 = arith.constant 0 : i32
    return %c0_i32, %c0_i32_0 : i32, i32
  }
  func.func @transform_5(%arg0: i32) -> (i32, i32) {
    %c0_i32 = arith.constant 0 : i32
    %c0_i32_0 = arith.constant 0 : i32
    %c0_i32_1 = arith.constant 0 : i32
    return %c0_i32, %c0_i32_0 : i32, i32
  }
  func.func @transform_6(%arg0: i32) -> (i32, i32) {
    %c0_i32 = arith.constant 0 : i32
    %c0_i32_0 = arith.constant 0 : i32
    %c0_i32_1 = arith.constant 0 : i32
    return %c0_i32, %c0_i32_0 : i32, i32
  }
  func.func @transform_7(%arg0: i32) -> (i32, i32) {
    %c0_i32 = arith.constant 0 : i32
    %c0_i32_0 = arith.constant 0 : i32
    %c0_i32_1 = arith.constant 0 : i32
    return %c0_i32, %c0_i32_0 : i32, i32
  }
  func.func @transform_8(%arg0: i32) -> (i32, i32) {
    %c0_i32 = arith.constant 0 : i32
    %c0_i32_0 = arith.constant 0 : i32
    return %arg0, %c0_i32 : i32, i32
  }
}

module attributes {stable_mosaic.version = 11 : i64} {
  func.func @_kd_kernel(%arg0: i32, %arg1: memref<32x32xf32, #tpu.memory_space<vmem>>, %arg2: memref<32x32xf32, #tpu.memory_space<vmem>>, %arg3: memref<32x32xf32, #tpu.memory_space<vmem>>, %arg4: memref<32x128xf32, #tpu.memory_space<vmem>>, %arg5: memref<1x128xf32, #tpu.memory_space<vmem>>, %arg6: memref<256x128xf32, #tpu.memory_space<vmem>>, %arg7: memref<1x128xf32, #tpu.memory_space<vmem>>, %arg8: memref<32x128xf32, #tpu.memory_space<vmem>>, %arg9: memref<32x128xf32, #tpu.memory_space<vmem>>) attributes {dimension_semantics = [#tpu.dimension_semantics<parallel>], iteration_bounds = array<i64: 2>, scalar_prefetch = 0 : i64, scratch_operands = 0 : i64, tpu.core_type = #tpu.core_type<tc>, window_params = [{transform_indices = @transform_0, window_bounds = array<i64: 32, 32>}, {transform_indices = @transform_1, window_bounds = array<i64: 32, 32>}, {transform_indices = @transform_2, window_bounds = array<i64: 32, 32>}, {pipeline_mode = #tpu.pipeline_mode<synchronous>, transform_indices = @transform_3, window_bounds = array<i64: 32, 128>}, {pipeline_mode = #tpu.pipeline_mode<synchronous>, transform_indices = @transform_4, window_bounds = array<i64: 1, 128>}, {pipeline_mode = #tpu.pipeline_mode<synchronous>, transform_indices = @transform_5, window_bounds = array<i64: 256, 128>}, {pipeline_mode = #tpu.pipeline_mode<synchronous>, transform_indices = @transform_6, window_bounds = array<i64: 1, 128>}, {pipeline_mode = #tpu.pipeline_mode<synchronous>, transform_indices = @transform_7, window_bounds = array<i64: 32, 128>}, {transform_indices = @transform_8, window_bounds = array<i64: 32, 128>}]} {
    %c0 = arith.constant 0 : index
    %c0_0 = arith.constant 0 : index
    %0 = vector.load %arg1[%c0, %c0_0] : memref<32x32xf32, #tpu.memory_space<vmem>>, vector<32x32xf32>
    %c0_1 = arith.constant 0 : index
    %c0_2 = arith.constant 0 : index
    %1 = vector.load %arg4[%c0_1, %c0_2] : memref<32x128xf32, #tpu.memory_space<vmem>>, vector<32x128xf32>
    %cst = arith.constant dense<0.000000e+00> : vector<32x128xf32>
    %2 = tpu.matmul %0, %1, %cst {dimension_numbers = #tpu.dot_dimension_numbers<[1], [0], [0], [1], [0, 0, 1, 1], [], []>} : vector<32x32xf32>, vector<32x128xf32>, vector<32x128xf32> -> vector<32x128xf32>
    %c0_3 = arith.constant 0 : index
    %c0_4 = arith.constant 0 : index
    %3 = vector.load %arg5[%c0_3, %c0_4] : memref<1x128xf32, #tpu.memory_space<vmem>>, vector<1x128xf32>
    %4 = vector.broadcast %3 : vector<1x128xf32> to vector<32x128xf32>
    %5 = arith.addf %2, %4 : vector<32x128xf32>
    %cst_5 = arith.constant 0.000000e+00 : f32
    %6 = vector.broadcast %cst_5 : f32 to vector<32x128xf32>
    %7 = arith.cmpf ogt, %5, %6 : vector<32x128xf32>
    %cst_6 = arith.constant 0.00999999977 : f32
    %8 = vector.broadcast %cst_6 : f32 to vector<32x128xf32>
    %9 = arith.mulf %8, %5 : vector<32x128xf32>
    %10 = arith.select %7, %5, %9 : vector<32x128xi1>, vector<32x128xf32>
    %c0_7 = arith.constant 0 : index
    %c0_8 = arith.constant 0 : index
    %11 = vector.load %arg2[%c0_7, %c0_8] : memref<32x32xf32, #tpu.memory_space<vmem>>, vector<32x32xf32>
    %c0_9 = arith.constant 0 : index
    %c0_10 = arith.constant 0 : index
    %12 = vector.load %arg4[%c0_9, %c0_10] : memref<32x128xf32, #tpu.memory_space<vmem>>, vector<32x128xf32>
    %cst_11 = arith.constant dense<0.000000e+00> : vector<32x128xf32>
    %13 = tpu.matmul %11, %12, %cst_11 {dimension_numbers = #tpu.dot_dimension_numbers<[1], [0], [0], [1], [0, 0, 1, 1], [], []>} : vector<32x32xf32>, vector<32x128xf32>, vector<32x128xf32> -> vector<32x128xf32>
    %c0_12 = arith.constant 0 : index
    %c0_13 = arith.constant 0 : index
    %14 = vector.load %arg5[%c0_12, %c0_13] : memref<1x128xf32, #tpu.memory_space<vmem>>, vector<1x128xf32>
    %15 = vector.broadcast %14 : vector<1x128xf32> to vector<32x128xf32>
    %16 = arith.addf %13, %15 : vector<32x128xf32>
    %cst_14 = arith.constant 0.000000e+00 : f32
    %17 = vector.broadcast %cst_14 : f32 to vector<32x128xf32>
    %18 = arith.cmpf ogt, %16, %17 : vector<32x128xf32>
    %cst_15 = arith.constant 0.00999999977 : f32
    %19 = vector.broadcast %cst_15 : f32 to vector<32x128xf32>
    %20 = arith.mulf %19, %16 : vector<32x128xf32>
    %21 = arith.select %18, %16, %20 : vector<32x128xi1>, vector<32x128xf32>
    %c0_16 = arith.constant 0 : index
    %c0_17 = arith.constant 0 : index
    %22 = vector.load %arg6[%c0_16, %c0_17] : memref<256x128xf32, #tpu.memory_space<vmem>>, vector<128x128xf32>
    %c128 = arith.constant 128 : index
    %c0_18 = arith.constant 0 : index
    %23 = vector.load %arg6[%c128, %c0_18] : memref<256x128xf32, #tpu.memory_space<vmem>>, vector<128x128xf32>
    %cst_19 = arith.constant dense<0.000000e+00> : vector<32x128xf32>
    %24 = tpu.matmul %10, %22, %cst_19 {dimension_numbers = #tpu.dot_dimension_numbers<[1], [0], [0], [1], [0, 0, 1, 1], [], []>} : vector<32x128xf32>, vector<128x128xf32>, vector<32x128xf32> -> vector<32x128xf32>
    %cst_20 = arith.constant dense<0.000000e+00> : vector<32x128xf32>
    %25 = tpu.matmul %21, %23, %cst_20 {dimension_numbers = #tpu.dot_dimension_numbers<[1], [0], [0], [1], [0, 0, 1, 1], [], []>} : vector<32x128xf32>, vector<128x128xf32>, vector<32x128xf32> -> vector<32x128xf32>
    %26 = arith.addf %24, %25 : vector<32x128xf32>
    %c0_21 = arith.constant 0 : index
    %c0_22 = arith.constant 0 : index
    %27 = vector.load %arg7[%c0_21, %c0_22] : memref<1x128xf32, #tpu.memory_space<vmem>>, vector<1x128xf32>
    %28 = vector.broadcast %27 : vector<1x128xf32> to vector<32x128xf32>
    %29 = arith.addf %26, %28 : vector<32x128xf32>
    %c0_23 = arith.constant 0 : index
    %c0_24 = arith.constant 0 : index
    %30 = vector.load %arg3[%c0_23, %c0_24] : memref<32x32xf32, #tpu.memory_space<vmem>>, vector<32x32xf32>
    %c0_25 = arith.constant 0 : index
    %c0_26 = arith.constant 0 : index
    %31 = vector.load %arg8[%c0_25, %c0_26] : memref<32x128xf32, #tpu.memory_space<vmem>>, vector<32x128xf32>
    %cst_27 = arith.constant dense<0.000000e+00> : vector<32x128xf32>
    %32 = tpu.matmul %30, %31, %cst_27 {dimension_numbers = #tpu.dot_dimension_numbers<[1], [0], [0], [1], [0, 0, 1, 1], [], []>} : vector<32x32xf32>, vector<32x128xf32>, vector<32x128xf32> -> vector<32x128xf32>
    %33 = arith.addf %32, %29 : vector<32x128xf32>
    %c0_28 = arith.constant 0 : index
    %c0_29 = arith.constant 0 : index
    %34 = vector.load %arg9[%c0_28, %c0_29] : memref<32x128xf32, #tpu.memory_space<vmem>>, vector<32x128xf32>
    tpu.vector_store %arg9[%c0_28, %c0_29], %33 {strides = array<i32>} : memref<32x128xf32, #tpu.memory_space<vmem>>, vector<32x128xf32>,
    return
  }
  func.func @transform_0(%arg0: i32) -> (i32, i32) {
    %c0_i32 = arith.constant 0 : i32
    %c0_i32_0 = arith.constant 0 : i32
    return %arg0, %c0_i32 : i32, i32
  }
  func.func @transform_1(%arg0: i32) -> (i32, i32) {
    %c0_i32 = arith.constant 0 : i32
    %c0_i32_0 = arith.constant 0 : i32
    return %arg0, %c0_i32 : i32, i32
  }
  func.func @transform_2(%arg0: i32) -> (i32, i32) {
    %c0_i32 = arith.constant 0 : i32
    %c0_i32_0 = arith.constant 0 : i32
    return %arg0, %c0_i32 : i32, i32
  }
  func.func @transform_3(%arg0: i32) -> (i32, i32) {
    %c0_i32 = arith.constant 0 : i32
    %c0_i32_0 = arith.constant 0 : i32
    %c0_i32_1 = arith.constant 0 : i32
    return %c0_i32, %c0_i32_0 : i32, i32
  }
  func.func @transform_4(%arg0: i32) -> (i32, i32) {
    %c0_i32 = arith.constant 0 : i32
    %c0_i32_0 = arith.constant 0 : i32
    %c0_i32_1 = arith.constant 0 : i32
    return %c0_i32, %c0_i32_0 : i32, i32
  }
  func.func @transform_5(%arg0: i32) -> (i32, i32) {
    %c0_i32 = arith.constant 0 : i32
    %c0_i32_0 = arith.constant 0 : i32
    %c0_i32_1 = arith.constant 0 : i32
    return %c0_i32, %c0_i32_0 : i32, i32
  }
  func.func @transform_6(%arg0: i32) -> (i32, i32) {
    %c0_i32 = arith.constant 0 : i32
    %c0_i32_0 = arith.constant 0 : i32
    %c0_i32_1 = arith.constant 0 : i32
    return %c0_i32, %c0_i32_0 : i32, i32
  }
  func.func @transform_7(%arg0: i32) -> (i32, i32) {
    %c0_i32 = arith.constant 0 : i32
    %c0_i32_0 = arith.constant 0 : i32
    %c0_i32_1 = arith.constant 0 : i32
    return %c0_i32, %c0_i32_0 : i32, i32
  }
  func.func @transform_8(%arg0: i32) -> (i32, i32) {
    %c0_i32 = arith.constant 0 : i32
    %c0_i32_0 = arith.constant 0 : i32
    return %arg0, %c0_i32 : i32, i32
  }
}

</mosaic_0001>

<llo_original>
// kernel: tpu_custom_call.1
$region0: #{tpu_custom_call.1}
  #allocation0 [shape = 'u32[]', space=smem, size = 0x4, offset = 0x4, fixed_abs, tag = 'smem constant byte address 0x4 - core index']
  #allocation1 [shape = 'u32[144,128]{1,0:T(1,128)}', space=vmem, size = 0x12000, scoped, tag = 'internal scratch']
  %s0 = inlined_call_operand.vmem [shape: f32[64,32], index: 0, kind: input, shape index: {}]
  %s1 = inlined_call_operand.vmem [shape: f32[64,32], index: 1, kind: input, shape index: {}]
  %s2 = inlined_call_operand.vmem [shape: f32[64,32], index: 2, kind: input, shape index: {}]
  %s3 = inlined_call_operand.vmem [shape: f32[32,128], index: 3, kind: input, shape index: {}]
  %s4 = inlined_call_operand.vmem [shape: f32[1,128], index: 4, kind: input, shape index: {}]
  %s5 = inlined_call_operand.vmem [shape: f32[256,128], index: 5, kind: input, shape index: {}]
  %s6 = inlined_call_operand.vmem [shape: f32[1,128], index: 6, kind: input, shape index: {}]
  %s7 = inlined_call_operand.hbm [shape: f32[32,128], index: 7, kind: input, shape index: {}]
  %s8 = inlined_call_operand.hbm [shape: f32[64,128], index: 8, kind: output, shape index: {}]
  %s9 = sld [smem:[#allocation0]]
  $region69: #{tpu_custom_call.1} parent=0
    _
  %s11 = ssub.s32 1, %s9
  %s12 = scalar_select 0, %s11, %s9
  $region1: #{tpu_custom_call.1} parent=0
    #allocation2 [shape = 'u8[16384]{0}', space=vmem, size = 0x4000, scoped, tag = 'input window, operand 7, single buffered']
    #allocation3 [shape = 's32[2]{0}', space=sflag, size = 0x8, scoped, tag = 'scoped memory for tpu_custom_call.1']
    #allocation4 [shape = 's32[2]{0}', space=sflag, size = 0x8, scoped, tag = 'scoped memory for tpu_custom_call.1']
    #allocation5 [shape = 'u8[32768]{0}', space=vmem, size = 0x8000, scoped, tag = 'output window, operand 0']
    %13 = vsyncpa [#allocation3], 0
    %14 = vsyncpa [#allocation4], 0
    %s15 = scalar_lea.sflag [#allocation4], 1
    %16 = vsyncpa %s15, 0
    loop: start=0, step=1, limit=4
    $region2: #{tpu_custom_call.1} parent=1 // loop_pre_header
      _
    $region3: #{tpu_custom_call.1} parent=1 // loop_header
      %s18 = sphi 0, %s22
      %p19 = scmp.ge.s32.totalorder %s18, 4
      %s28 = sphi 0, %s30
      %s31 = sphi 0, %s28
      %s32 = sphi 0, %s31
      %s48 = sphi 0, %s32
      %s54 = sphi 0, %s56
      %s57 = sphi 0, %s54
      %s58 = sphi 0, %s57
      %s74 = sphi 0, %s58
      %s80 = sphi 0, %s82
      %s83 = sphi 0, %s80
      %s84 = sphi 0, %s83
      %s100 = sphi 0, %s84
      %s104 = sphi 0, %s104
      %s106 = sphi 0, %s104
      %s107 = sphi 0, %s106
      %s121 = sphi 0, %s107
      %s125 = sphi 0, %s125
      %s127 = sphi 0, %s125
      %s128 = sphi 0, %s127
      %s142 = sphi 0, %s128
      %s146 = sphi 0, %s146
      %s148 = sphi 0, %s146
      %s149 = sphi 0, %s148
      %s163 = sphi 0, %s149
      %s167 = sphi 0, %s167
      %s169 = sphi 0, %s167
      %s170 = sphi 0, %s169
      %s184 = sphi 0, %s170
      %s188 = sphi 0, %s188
      %s190 = sphi 0, %s188
      %s191 = sphi 0, %s190
      %s205 = sphi 0, %s191
      %s211 = sphi 0, %s213
      %s214 = sphi 0, %s211
      %s215 = sphi 0, %s214
      %s231 = sphi 0, %s215
    $region4: #{tpu_custom_call.1} parent=1 // loop_header_branch
      %21 = sbr.rel (%p19) target = $region8
    $region5: #{tpu_custom_call.1} parent=1 // loop_body
      %s23 = ssub.s32 %s18, 1
      %s24 = ssub.s32 %s18, 2
      %s25 = sadd.s32 %s18, 1
      %s26 = ssub.s32 %s18, %s25
      %p27 = scmp.eq.s32.totalorder %s26, 0
      %s29 = sadd.s32 %s28, 1
      %s30 = scalar_select %p27, %s28, %s29
      %p33 = pneg %p27
      %p34 = scmp.eq.s32.totalorder %s18, 1
      %p35 = por %p33, %p34
      %p36 = scmp.ne.s32.totalorder %s28, %s31
      %p37 = scmp.eq.s32.totalorder %s18, 0
      %p38 = por %p36, %p37
      %p39 = scmp.ne.s32.totalorder %s28, %s31
      %p40 = scmp.eq.s32.totalorder %s23, 1
      %p41 = por %p39, %p40
      %p42 = scmp.ne.s32.totalorder %s31, %s32
      %p43 = scmp.eq.s32.totalorder %s23, 0
      %p44 = por %p42, %p43
      %p45 = scmp.ne.s32.totalorder %s31, %s32
      %p46 = scmp.eq.s32.totalorder %s24, 1
      %p47 = por %p45, %p46
      %p49 = scmp.ne.s32.totalorder %s32, %s48
      %p50 = scmp.eq.s32.totalorder %s24, 0
      %p51 = por %p49, %p50
      %s52 = ssub.s32 %s18, %s25
      %p53 = scmp.eq.s32.totalorder %s52, 0
      %s55 = sadd.s32 %s54, 1
      %s56 = scalar_select %p53, %s54, %s55
      %p59 = pneg %p53
      %p60 = scmp.eq.s32.totalorder %s18, 1
      %p61 = por %p59, %p60
      %p62 = scmp.ne.s32.totalorder %s54, %s57
      %p63 = scmp.eq.s32.totalorder %s18, 0
      %p64 = por %p62, %p63
      %p65 = scmp.ne.s32.totalorder %s54, %s57
      %p66 = scmp.eq.s32.totalorder %s23, 1
      %p67 = por %p65, %p66
      %p68 = scmp.ne.s32.totalorder %s57, %s58
      %p69 = scmp.eq.s32.totalorder %s23, 0
      %p70 = por %p68, %p69
      %p71 = scmp.ne.s32.totalorder %s57, %s58
      %p72 = scmp.eq.s32.totalorder %s24, 1
      %p73 = por %p71, %p72
      %p75 = scmp.ne.s32.totalorder %s58, %s74
      %p76 = scmp.eq.s32.totalorder %s24, 0
      %p77 = por %p75, %p76
      %s78 = ssub.s32 %s18, %s25
      %p79 = scmp.eq.s32.totalorder %s78, 0
      %s81 = sadd.s32 %s80, 1
      %s82 = scalar_select %p79, %s80, %s81
      %p85 = pneg %p79
      %p86 = scmp.eq.s32.totalorder %s18, 1
      %p87 = por %p85, %p86
      %p88 = scmp.ne.s32.totalorder %s80, %s83
      %p89 = scmp.eq.s32.totalorder %s18, 0
      %p90 = por %p88, %p89
      %p91 = scmp.ne.s32.totalorder %s80, %s83
      %p92 = scmp.eq.s32.totalorder %s23, 1
      %p93 = por %p91, %p92
      %p94 = scmp.ne.s32.totalorder %s83, %s84
      %p95 = scmp.eq.s32.totalorder %s23, 0
      %p96 = por %p94, %p95
      %p97 = scmp.ne.s32.totalorder %s83, %s84
      %p98 = scmp.eq.s32.totalorder %s24, 1
      %p99 = por %p97, %p98
      %p101 = scmp.ne.s32.totalorder %s84, %s100
      %p102 = scmp.eq.s32.totalorder %s24, 0
      %p103 = por %p101, %p102
      %s105 = sadd.s32 %s104, 1
      %p108 = scmp.eq.s32.totalorder %s18, 1
      %p109 = scmp.ne.s32.totalorder %s104, %s106
      %p110 = scmp.eq.s32.totalorder %s18, 0
      %p111 = por %p109, %p110
      %p112 = scmp.ne.s32.totalorder %s104, %s106
      %p113 = scmp.eq.s32.totalorder %s23, 1
      %p114 = por %p112, %p113
      %p115 = scmp.ne.s32.totalorder %s106, %s107
      %p116 = scmp.eq.s32.totalorder %s23, 0
      %p117 = por %p115, %p116
      %p118 = scmp.ne.s32.totalorder %s106, %s107
      %p119 = scmp.eq.s32.totalorder %s24, 1
      %p120 = por %p118, %p119
      %p122 = scmp.ne.s32.totalorder %s107, %s121
      %p123 = scmp.eq.s32.totalorder %s24, 0
      %p124 = por %p122, %p123
      %s126 = sadd.s32 %s125, 1
      %p129 = scmp.eq.s32.totalorder %s18, 1
      %p130 = scmp.ne.s32.totalorder %s125, %s127
      %p131 = scmp.eq.s32.totalorder %s18, 0
      %p132 = por %p130, %p131
      %p133 = scmp.ne.s32.totalorder %s125, %s127
      %p134 = scmp.eq.s32.totalorder %s23, 1
      %p135 = por %p133, %p134
      %p136 = scmp.ne.s32.totalorder %s127, %s128
      %p137 = scmp.eq.s32.totalorder %s23, 0
      %p138 = por %p136, %p137
      %p139 = scmp.ne.s32.totalorder %s127, %s128
      %p140 = scmp.eq.s32.totalorder %s24, 1
      %p141 = por %p139, %p140
      %p143 = scmp.ne.s32.totalorder %s128, %s142
      %p144 = scmp.eq.s32.totalorder %s24, 0
      %p145 = por %p143, %p144
      %s147 = sadd.s32 %s146, 1
      %p150 = scmp.eq.s32.totalorder %s18, 1
      %p151 = scmp.ne.s32.totalorder %s146, %s148
      %p152 = scmp.eq.s32.totalorder %s18, 0
      %p153 = por %p151, %p152
      %p154 = scmp.ne.s32.totalorder %s146, %s148
      %p155 = scmp.eq.s32.totalorder %s23, 1
      %p156 = por %p154, %p155
      %p157 = scmp.ne.s32.totalorder %s148, %s149
      %p158 = scmp.eq.s32.totalorder %s23, 0
      %p159 = por %p157, %p158
      %p160 = scmp.ne.s32.totalorder %s148, %s149
      %p161 = scmp.eq.s32.totalorder %s24, 1
      %p162 = por %p160, %p161
      %p164 = scmp.ne.s32.totalorder %s149, %s163
      %p165 = scmp.eq.s32.totalorder %s24, 0
      %p166 = por %p164, %p165
      %s168 = sadd.s32 %s167, 1
      %p171 = scmp.eq.s32.totalorder %s18, 1
      %p172 = scmp.ne.s32.totalorder %s167, %s169
      %p173 = scmp.eq.s32.totalorder %s18, 0
      %p174 = por %p172, %p173
      %p175 = scmp.ne.s32.totalorder %s167, %s169
      %p176 = scmp.eq.s32.totalorder %s23, 1
      %p177 = por %p175, %p176
      %p178 = scmp.ne.s32.totalorder %s169, %s170
      %p179 = scmp.eq.s32.totalorder %s23, 0
      %p180 = por %p178, %p179
      %p181 = scmp.ne.s32.totalorder %s169, %s170
      %p182 = scmp.eq.s32.totalorder %s24, 1
      %p183 = por %p181, %p182
      %p185 = scmp.ne.s32.totalorder %s170, %s184
      %p186 = scmp.eq.s32.totalorder %s24, 0
      %p187 = por %p185, %p186
      %s189 = sadd.s32 %s188, 1
      %p192 = scmp.eq.s32.totalorder %s18, 1
      %p193 = scmp.ne.s32.totalorder %s188, %s190
      %p194 = scmp.eq.s32.totalorder %s18, 0
      %p195 = por %p193, %p194
      %p196 = scmp.ne.s32.totalorder %s188, %s190
      %p197 = scmp.eq.s32.totalorder %s23, 1
      %p198 = por %p196, %p197
      %p199 = scmp.ne.s32.totalorder %s190, %s191
      %p200 = scmp.eq.s32.totalorder %s23, 0
      %p201 = por %p199, %p200
      %p202 = scmp.ne.s32.totalorder %s190, %s191
      %p203 = scmp.eq.s32.totalorder %s24, 1
      %p204 = por %p202, %p203
      %p206 = scmp.ne.s32.totalorder %s191, %s205
      %p207 = scmp.eq.s32.totalorder %s24, 0
      %p208 = por %p206, %p207
      %s209 = ssub.s32 %s18, %s25
      %p210 = scmp.eq.s32.totalorder %s209, 0
      %s212 = sadd.s32 %s211, 1
      %s213 = scalar_select %p210, %s211, %s212
      %p216 = pneg %p210
      %p217 = scmp.eq.s32.totalorder %s18, 1
      %p218 = por %p216, %p217
      %p219 = scmp.ne.s32.totalorder %s211, %s214
      %p220 = scmp.eq.s32.totalorder %s18, 0
      %p221 = por %p219, %p220
      %p222 = scmp.ne.s32.totalorder %s211, %s214
      %p223 = scmp.eq.s32.totalorder %s23, 1
      %p224 = por %p222, %p223
      %p225 = scmp.ne.s32.totalorder %s214, %s215
      %p226 = scmp.eq.s32.totalorder %s23, 0
      %p227 = por %p225, %p226
      %p228 = scmp.ne.s32.totalorder %s214, %s215
      %p229 = scmp.eq.s32.totalorder %s24, 1
      %p230 = por %p228, %p229
      %p232 = scmp.ne.s32.totalorder %s215, %s231
      %p233 = scmp.eq.s32.totalorder %s24, 0
      %p234 = por %p232, %p233
      %p235 = scmp.le.s32.totalorder 1, %s18
      %p236 = scmp.lt.s32.totalorder %s18, 3
      %p237 = pnand %p235, %p236
      %p238 = pneg %p237
      // Predicated region
      $region9: #{tpu_custom_call.1} parent=5 // pred_check
        _
      $region10: #{tpu_custom_call.1} parent=5 // pred_check_branch
        %240 = sbr.rel (%p237) target = $region12
      $region11: #{tpu_custom_call.1} parent=5 // pred_region
        %s241 = ssub.s32 %s18, 1
        // Predicated region
        $region13: #{tpu_custom_call.1} parent=11 // pred_check
          %p242 = pneg %p117
        $region14: #{tpu_custom_call.1} parent=11 // pred_check_branch
          %244 = sbr.rel (%p242) target = $region16
        $region15: #{tpu_custom_call.1} parent=11 // pred_region
          _
        $region16: #{tpu_custom_call.1} parent=11 // pred_fallthru
          _
        // Predicated region
        $region17: #{tpu_custom_call.1} parent=11 // pred_check
          %p245 = pneg %p138
        $region18: #{tpu_custom_call.1} parent=11 // pred_check_branch
          %247 = sbr.rel (%p245) target = $region20
        $region19: #{tpu_custom_call.1} parent=11 // pred_region
          _
        $region20: #{tpu_custom_call.1} parent=11 // pred_fallthru
          _
        // Predicated region
        $region21: #{tpu_custom_call.1} parent=11 // pred_check
          %p248 = pneg %p159
        $region22: #{tpu_custom_call.1} parent=11 // pred_check_branch
          %250 = sbr.rel (%p248) target = $region24
        $region23: #{tpu_custom_call.1} parent=11 // pred_region
          _
        $region24: #{tpu_custom_call.1} parent=11 // pred_fallthru
          _
        // Predicated region
        $region25: #{tpu_custom_call.1} parent=11 // pred_check
          %p251 = pneg %p180
        $region26: #{tpu_custom_call.1} parent=11 // pred_check_branch
          %253 = sbr.rel (%p251) target = $region28
        $region27: #{tpu_custom_call.1} parent=11 // pred_region
          _
        $region28: #{tpu_custom_call.1} parent=11 // pred_fallthru
          _
        // Predicated region
        $region29: #{tpu_custom_call.1} parent=11 // pred_check
          %p254 = pneg %p201
        $region30: #{tpu_custom_call.1} parent=11 // pred_check_branch
          %256 = sbr.rel (%p254) target = $region32
        $region31: #{tpu_custom_call.1} parent=11 // pred_region
          %s258 = ssub.s32 512, 512
          %259 = vsyncadd [#allocation3], %s258
          %s260 = sshll.u32 [#allocation2], 4
          %s261 = int_to_ptr.vmem [resolvable:$true] %s260
          %266 = dma.hbm_to_vmem [thread:$0]  %s7, 512, %s261, [#allocation3], 128, 128, 8
        $region32: #{tpu_custom_call.1} parent=11 // pred_fallthru
          _
      $region12: #{tpu_custom_call.1} parent=5 // pred_fallthru
        _
      %p267 = scmp.lt.s32.totalorder %s18, 2
      // Predicated region
      $region33: #{tpu_custom_call.1} parent=5 // pred_check
        %p268 = pneg %p267
      $region34: #{tpu_custom_call.1} parent=5 // pred_check_branch
        %270 = sbr.rel (%p268) target = $region36
      $region35: #{tpu_custom_call.1} parent=5 // pred_region
        // Predicated region
        $region37: #{tpu_custom_call.1} parent=35 // pred_check
          %p271 = pneg %p38
        $region38: #{tpu_custom_call.1} parent=35 // pred_check_branch
          %273 = sbr.rel (%p271) target = $region40
        $region39: #{tpu_custom_call.1} parent=35 // pred_region
          %s274 = smul.u32 4, %s18
          %p275 = scmp.lt.s32.totalorder %s274, 7
          %s276 = scalar_select %p275, %s274, 7
          %s277 = smul.addr %s276, 8
          %s278 = scalar_lea.vmem %s0, %s277
          %s279 = smul.u32 4, %s18
        $region40: #{tpu_custom_call.1} parent=35 // pred_fallthru
          _
        // Predicated region
        $region41: #{tpu_custom_call.1} parent=35 // pred_check
          %p280 = pneg %p64
        $region42: #{tpu_custom_call.1} parent=35 // pred_check_branch
          %282 = sbr.rel (%p280) target = $region44
        $region43: #{tpu_custom_call.1} parent=35 // pred_region
          %s283 = smul.u32 4, %s18
          %p284 = scmp.lt.s32.totalorder %s283, 7
          %s285 = scalar_select %p284, %s283, 7
          %s286 = smul.addr %s285, 8
          %s287 = scalar_lea.vmem %s1, %s286
          %s288 = smul.u32 4, %s18
        $region44: #{tpu_custom_call.1} parent=35 // pred_fallthru
          _
        // Predicated region
        $region45: #{tpu_custom_call.1} parent=35 // pred_check
          %p289 = pneg %p90
        $region46: #{tpu_custom_call.1} parent=35 // pred_check_branch
          %291 = sbr.rel (%p289) target = $region48
        $region47: #{tpu_custom_call.1} parent=35 // pred_region
          %s292 = smul.u32 4, %s18
          %p293 = scmp.lt.s32.totalorder %s292, 7
          %s294 = scalar_select %p293, %s292, 7
          %s295 = smul.addr %s294, 8
          %s296 = scalar_lea.vmem %s2, %s295
          %s297 = smul.u32 4, %s18
        $region48: #{tpu_custom_call.1} parent=35 // pred_fallthru
          _
      $region36: #{tpu_custom_call.1} parent=5 // pred_fallthru
        _
      %p298 = scmp.le.s32.totalorder 1, %s18
      %p299 = scmp.lt.s32.totalorder %s18, 3
      %p300 = pnand %p298, %p299
      %p301 = pneg %p300
      // Predicated region
      $region49: #{tpu_custom_call.1} parent=5 // pred_check
        _
      $region50: #{tpu_custom_call.1} parent=5 // pred_check_branch
        %303 = sbr.rel (%p300) target = $region52
      $region51: #{tpu_custom_call.1} parent=5 // pred_region
        %s304 = ssub.s32 %s18, 1
        // Predicated region
        $region53: #{tpu_custom_call.1} parent=51 // pred_check
          %p305 = pneg %p201
        $region54: #{tpu_custom_call.1} parent=51 // pred_check_branch
          %307 = sbr.rel (%p305) target = $region56
        $region55: #{tpu_custom_call.1} parent=51 // pred_region
          %308 = dma.done [#allocation3], 512
        $region56: #{tpu_custom_call.1} parent=51 // pred_fallthru
          _
        %s309 = smul.u32 4, %s23
        %p310 = scmp.lt.s32.totalorder %s309, 7
        %s311 = scalar_select %p310, %s309, 7
        %s312 = smul.addr %s311, 8
        %s313 = scalar_lea.vmem %s0, %s312
        %p314 = pneg %p44
        %p315 = pneg %p41
        %s316 = smul.u32 4, %s23
        %p317 = scmp.lt.s32.totalorder %s316, 7
        %s318 = scalar_select %p317, %s316, 7
        %s319 = smul.addr %s318, 8
        %s320 = scalar_lea.vmem %s1, %s319
        %p321 = pneg %p70
        %p322 = pneg %p67
        %s323 = smul.u32 4, %s23
        %p324 = scmp.lt.s32.totalorder %s323, 7
        %s325 = scalar_select %p324, %s323, 7
        %s326 = smul.addr %s325, 8
        %s327 = scalar_lea.vmem %s2, %s326
        %p328 = pneg %p96
        %p329 = pneg %p93
        %p330 = pneg %p117
        %p331 = pneg %p114
        %p332 = pneg %p138
        %p333 = pneg %p135
        %p334 = pneg %p159
        %p335 = pneg %p156
        %p336 = pneg %p180
        %p337 = pneg %p177
        %p338 = pneg %p201
        %p339 = pneg %p198
        %p340 = pneg %p227
        %p341 = pneg %p224
        %s342 = sand.u32 %s214, 1
        %s343 = scalar_lea.sflag [#allocation4], %s342
        %s344 = sand.u32 %s214, 1
        %s345 = smul.addr %s344, 32
        %s346 = scalar_lea.vmem [#allocation5], %s345
        %s347 = smul.u32 4, %s23
        %p348 = scmp.lt.s32.totalorder %s347, 7
        %s349 = scalar_select %p348, %s347, 7
        %s350 = smul.addr %s349, 8
        %s351 = scalar_lea.vmem %s0, %s350
        %s352 = smul.u32 4, %s23
        %s353 = smul.u32 4, %s23
        %p354 = scmp.lt.s32.totalorder %s353, 7
        %s355 = scalar_select %p354, %s353, 7
        %s356 = smul.addr %s355, 8
        %s357 = scalar_lea.vmem %s1, %s356
        %s358 = smul.u32 4, %s23
        %s359 = smul.u32 4, %s23
        %p360 = scmp.lt.s32.totalorder %s359, 7
        %s361 = scalar_select %p360, %s359, 7
        %s362 = smul.addr %s361, 8
        %s363 = scalar_lea.vmem %s2, %s362
        %s364 = smul.u32 4, %s23
        %s365 = smul.u32 4, %s23
        %v366 = vld [vmem:[%s351] sm:$0xff]
        %v367 = vld [vmem:[%s351 + $0x8] sm:$0xff]
        %v368 = vld [vmem:[%s351 + $0x10] sm:$0xff]
        %v369 = vld [vmem:[%s351 + $0x18] sm:$0xff]
        %v370 = vld [vmem:[%s3] sm:$0xff]
        %v371 = vld [vmem:[%s3 + $0x8] sm:$0xff]
        %v372 = vld [vmem:[%s3 + $0x10] sm:$0xff]
        %v373 = vld [vmem:[%s3 + $0x18] sm:$0xff]
        %v374 = vld [vmem:[%s4] sm:$0x1]
        %v376 = vlaneseq
        %v377 = vshrl.u32 %v376, 7
        %v378 = vsub.s32 0, %v377
        %v379 = vrot.slane %v374, %v378
        %vm381 = vcmask 261120
        %v383 = vsel %vm381, %v366, 0
        %v386 = vsel %vm381, %v367, 0
        %v389 = vsel %vm381, %v368, 0
        %v392 = vsel %vm381, %v369, 0
        %394 = vmatprep.subr.mxu0 0.0
        %395 = vmatpush1.msra.mxu0 %v370
        %396 = vmatprep.subr.mxu0 0.0
        %397 = vmatpush1.msra.mxu0 %v371
        %398 = vmatprep.subr.mxu0 0.0
        %399 = vmatpush1.msra.mxu0 %v372
        %400 = vmatprep.subr.mxu0 0.0
        %401 = vmatpush1.msra.mxu0 %v373
        %402 = vmatprep.subr.mxu0 0.0
        %403 = vmatpush1.msra.mxu0 0.0
        %404 = vmatprep.subr.mxu0 0.0
        %405 = vmatpush1.msra.mxu0 0.0
        %406 = vmatprep.subr.mxu0 0.0
        %407 = vmatpush1.msra.mxu0 0.0
        %408 = vmatprep.subr.mxu0 0.0
        %409 = vmatpush1.msra.mxu0 0.0
        %410 = vmatprep.subr.mxu0 0.0
        %411 = vmatpush1.msra.mxu0 0.0
        %412 = vmatprep.subr.mxu0 0.0
        %413 = vmatpush1.msra.mxu0 0.0
        %414 = vmatprep.subr.mxu0 0.0
        %415 = vmatpush1.msra.mxu0 0.0
        %416 = vmatprep.subr.mxu0 0.0
        %417 = vmatpush1.msra.mxu0 0.0
        %418 = vmatprep.subr.mxu0 0.0
        %419 = vmatpush1.msra.mxu0 0.0
        %420 = vmatprep.subr.mxu0 0.0
        %421 = vmatpush1.msra.mxu0 0.0
        %422 = vmatprep.subr.mxu0 0.0
        %423 = vmatpush1.msra.mxu0 0.0
        %424 = vmatprep.subr.mxu0 0.0
        %425 = vmatpush1.msra.mxu0 0.0
        %426 = vmatprep.subr.mxu0 0.0
        %427 = vmatpush1.msra.mxu0 0.0
        %428 = vmatprep.subr.mxu0 0.0
        %429 = vmatpush1.msra.mxu0 0.0
        %430 = vmatprep.subr.mxu0 0.0
        %431 = vmatpush1.msra.mxu0 0.0
        %432 = vmatprep.subr.mxu0 0.0
        %433 = vmatpush1.msra.mxu0 0.0
        %434 = vmatprep.subr.mxu0 0.0
        %435 = vmatpush1.msra.mxu0 0.0
        %436 = vmatprep.subr.mxu0 0.0
        %437 = vmatpush1.msra.mxu0 0.0
        %438 = vmatprep.subr.mxu0 0.0
        %439 = vmatpush1.msra.mxu0 0.0
        %440 = vmatprep.subr.mxu0 0.0
        %441 = vmatpush1.msra.mxu0 0.0
        %442 = vmatprep.subr.mxu0 0.0
        %443 = vmatpush1.msra.mxu0 0.0
        %444 = vmatprep.subr.mxu0 0.0
        %445 = vmatpush1.msra.mxu0 0.0
        %446 = vmatprep.subr.mxu0 0.0
        %447 = vmatpush1.msra.mxu0 0.0
        %448 = vmatprep.subr.mxu0 0.0
        %449 = vmatpush1.msra.mxu0 0.0
        %450 = vmatprep.subr.mxu0 0.0
        %451 = vmatpush1.msra.mxu0 0.0
        %452 = vmatprep.subr.mxu0 0.0
        %453 = vmatpush1.msra.mxu0 0.0
        %454 = vmatprep.subr.mxu0 0.0
        %455 = vmatpush1.msra.mxu0 0.0
        %456 = vmatprep.subr.mxu0 0.0
        %457 = vmatpush1.msra.mxu0 0.0
        %458 = vmatprep.mubr.f32.mxu0 0.0
        %459 = vmatmul.mubr.f32.gmra.mrb[0].mxu0 %v383
        %v460 = vpop.f32.mrb[0].mxu0
        %v461 = vadd.f32 %v379, %v460
        %v462 = vpop.f32.mrb[0].mxu0
        %463 = vmatprep.mubr.f32.mxu0 0.0
        %464 = vmatmul.mubr.f32.gmra.mrb[0].mxu0 %v386
        %v465 = vpop.f32.mrb[0].mxu0
        %v466 = vadd.f32 %v379, %v465
        %v467 = vpop.f32.mrb[0].mxu0
        %468 = vmatprep.mubr.f32.mxu0 0.0
        %469 = vmatmul.mubr.f32.gmra.mrb[0].mxu0 %v389
        %v470 = vpop.f32.mrb[0].mxu0
        %v471 = vadd.f32 %v379, %v470
        %v472 = vpop.f32.mrb[0].mxu0
        %473 = vmatprep.mubr.f32.mxu0 0.0
        %474 = vmatmul.mubr.f32.gmra.mrb[0].mxu0 %v392
        %v475 = vpop.f32.mrb[0].mxu0
        %v476 = vadd.f32 %v379, %v475
        %v477 = vpop.f32.mrb[0].mxu0
        %478 = vdwg.mxu0
        %vm479 = vcmp.gt.f32.partialorder %v461, 0.0
        %vm480 = vcmp.gt.f32.partialorder %v466, 0.0
        %vm481 = vcmp.gt.f32.partialorder %v471, 0.0
        %vm482 = vcmp.gt.f32.partialorder %v476, 0.0
        %v483 = vmul.f32 %v461, 0.01
        %v484 = vmul.f32 %v466, 0.01
        %v485 = vmul.f32 %v471, 0.01
        %v486 = vmul.f32 %v476, 0.01
        %v487 = vsel %vm479, %v461, %v483
        %v488 = vsel %vm480, %v466, %v484
        %v489 = vsel %vm481, %v471, %v485
        %v490 = vsel %vm482, %v476, %v486
        %v491 = vld [vmem:[%s357] sm:$0xff]
        %v492 = vld [vmem:[%s357 + $0x8] sm:$0xff]
        %v493 = vld [vmem:[%s357 + $0x10] sm:$0xff]
        %v494 = vld [vmem:[%s357 + $0x18] sm:$0xff]
        %v496 = vsel %vm381, %v491, 0
        %v499 = vsel %vm381, %v492, 0
        %v502 = vsel %vm381, %v493, 0
        %v505 = vsel %vm381, %v494, 0
        %507 = vmatprep.subr.mxu0 0.0
        %508 = vmatpush1.msra.mxu0 %v370
        %509 = vmatprep.subr.mxu0 0.0
        %510 = vmatpush1.msra.mxu0 %v371
        %511 = vmatprep.subr.mxu0 0.0
        %512 = vmatpush1.msra.mxu0 %v372
        %513 = vmatprep.subr.mxu0 0.0
        %514 = vmatpush1.msra.mxu0 %v373
        %515 = vmatprep.subr.mxu0 0.0
        %516 = vmatpush1.msra.mxu0 0.0
        %517 = vmatprep.subr.mxu0 0.0
        %518 = vmatpush1.msra.mxu0 0.0
        %519 = vmatprep.subr.mxu0 0.0
        %520 = vmatpush1.msra.mxu0 0.0
        %521 = vmatprep.subr.mxu0 0.0
        %522 = vmatpush1.msra.mxu0 0.0
        %523 = vmatprep.subr.mxu0 0.0
        %524 = vmatpush1.msra.mxu0 0.0
        %525 = vmatprep.subr.mxu0 0.0
        %526 = vmatpush1.msra.mxu0 0.0
        %527 = vmatprep.subr.mxu0 0.0
        %528 = vmatpush1.msra.mxu0 0.0
        %529 = vmatprep.subr.mxu0 0.0
        %530 = vmatpush1.msra.mxu0 0.0
        %531 = vmatprep.subr.mxu0 0.0
        %532 = vmatpush1.msra.mxu0 0.0
        %533 = vmatprep.subr.mxu0 0.0
        %534 = vmatpush1.msra.mxu0 0.0
        %535 = vmatprep.subr.mxu0 0.0
        %536 = vmatpush1.msra.mxu0 0.0
        %537 = vmatprep.subr.mxu0 0.0
        %538 = vmatpush1.msra.mxu0 0.0
        %539 = vmatprep.subr.mxu0 0.0
        %540 = vmatpush1.msra.mxu0 0.0
        %541 = vmatprep.subr.mxu0 0.0
        %542 = vmatpush1.msra.mxu0 0.0
        %543 = vmatprep.subr.mxu0 0.0
        %544 = vmatpush1.msra.mxu0 0.0
        %545 = vmatprep.subr.mxu0 0.0
        %546 = vmatpush1.msra.mxu0 0.0
        %547 = vmatprep.subr.mxu0 0.0
        %548 = vmatpush1.msra.mxu0 0.0
        %549 = vmatprep.subr.mxu0 0.0
        %550 = vmatpush1.msra.mxu0 0.0
        %551 = vmatprep.subr.mxu0 0.0
        %552 = vmatpush1.msra.mxu0 0.0
        %553 = vmatprep.subr.mxu0 0.0
        %554 = vmatpush1.msra.mxu0 0.0
        %555 = vmatprep.subr.mxu0 0.0
        %556 = vmatpush1.msra.mxu0 0.0
        %557 = vmatprep.subr.mxu0 0.0
        %558 = vmatpush1.msra.mxu0 0.0
        %559 = vmatprep.subr.mxu0 0.0
        %560 = vmatpush1.msra.mxu0 0.0
        %561 = vmatprep.subr.mxu0 0.0
        %562 = vmatpush1.msra.mxu0 0.0
        %563 = vmatprep.subr.mxu0 0.0
        %564 = vmatpush1.msra.mxu0 0.0
        %565 = vmatprep.subr.mxu0 0.0
        %566 = vmatpush1.msra.mxu0 0.0
        %567 = vmatprep.subr.mxu0 0.0
        %568 = vmatpush1.msra.mxu0 0.0
        %569 = vmatprep.subr.mxu0 0.0
        %570 = vmatpush1.msra.mxu0 0.0
        %571 = vmatprep.mubr.f32.mxu0 0.0
        %572 = vmatmul.mubr.f32.gmra.mrb[0].mxu0 %v496
        %v573 = vpop.f32.mrb[0].mxu0
        %v574 = vadd.f32 %v379, %v573
        %v575 = vpop.f32.mrb[0].mxu0
        %576 = vmatprep.mubr.f32.mxu0 0.0
        %577 = vmatmul.mubr.f32.gmra.mrb[0].mxu0 %v499
        %v578 = vpop.f32.mrb[0].mxu0
        %v579 = vadd.f32 %v379, %v578
        %v580 = vpop.f32.mrb[0].mxu0
        %581 = vmatprep.mubr.f32.mxu0 0.0
        %582 = vmatmul.mubr.f32.gmra.mrb[0].mxu0 %v502
        %v583 = vpop.f32.mrb[0].mxu0
        %v584 = vadd.f32 %v379, %v583
        %v585 = vpop.f32.mrb[0].mxu0
        %586 = vmatprep.mubr.f32.mxu0 0.0
        %587 = vmatmul.mubr.f32.gmra.mrb[0].mxu0 %v505
        %v588 = vpop.f32.mrb[0].mxu0
        %v589 = vadd.f32 %v379, %v588
        %v590 = vpop.f32.mrb[0].mxu0
        %591 = vdwg.mxu0
        %vm592 = vcmp.gt.f32.partialorder %v574, 0.0
        %vm593 = vcmp.gt.f32.partialorder %v579, 0.0
        %vm594 = vcmp.gt.f32.partialorder %v584, 0.0
        %vm595 = vcmp.gt.f32.partialorder %v589, 0.0
        %v596 = vmul.f32 %v574, 0.01
        %v597 = vmul.f32 %v579, 0.01
        %v598 = vmul.f32 %v584, 0.01
        %v599 = vmul.f32 %v589, 0.01
        %v600 = vsel %vm592, %v574, %v596
        %v601 = vsel %vm593, %v579, %v597
        %v602 = vsel %vm594, %v584, %v598
        %v603 = vsel %vm595, %v589, %v599
        %v604 = vld [vmem:[%s5] sm:$0xff]
        %v605 = vld [vmem:[%s5 + $0x8] sm:$0xff]
        %v606 = vld [vmem:[%s5 + $0x10] sm:$0xff]
        %v607 = vld [vmem:[%s5 + $0x18] sm:$0xff]
        %v608 = vld [vmem:[%s5 + $0x20] sm:$0xff]
        %v609 = vld [vmem:[%s5 + $0x28] sm:$0xff]
        %v610 = vld [vmem:[%s5 + $0x30] sm:$0xff]
        %v611 = vld [vmem:[%s5 + $0x38] sm:$0xff]
        %v612 = vld [vmem:[%s5 + $0x40] sm:$0xff]
        %v613 = vld [vmem:[%s5 + $0x48] sm:$0xff]
        %v614 = vld [vmem:[%s5 + $0x50] sm:$0xff]
        %v615 = vld [vmem:[%s5 + $0x58] sm:$0xff]
        %v616 = vld [vmem:[%s5 + $0x60] sm:$0xff]
        %v617 = vld [vmem:[%s5 + $0x68] sm:$0xff]
        %v618 = vld [vmem:[%s5 + $0x70] sm:$0xff]
        %v619 = vld [vmem:[%s5 + $0x78] sm:$0xff]
        %v620 = vld [vmem:[%s5 + $0x80] sm:$0xff]
        %v621 = vld [vmem:[%s5 + $0x88] sm:$0xff]
        %v622 = vld [vmem:[%s5 + $0x90] sm:$0xff]
        %v623 = vld [vmem:[%s5 + $0x98] sm:$0xff]
        %v624 = vld [vmem:[%s5 + $0xa0] sm:$0xff]
        %v625 = vld [vmem:[%s5 + $0xa8] sm:$0xff]
        %v626 = vld [vmem:[%s5 + $0xb0] sm:$0xff]
        %v627 = vld [vmem:[%s5 + $0xb8] sm:$0xff]
        %v628 = vld [vmem:[%s5 + $0xc0] sm:$0xff]
        %v629 = vld [vmem:[%s5 + $0xc8] sm:$0xff]
        %v630 = vld [vmem:[%s5 + $0xd0] sm:$0xff]
        %v631 = vld [vmem:[%s5 + $0xd8] sm:$0xff]
        %v632 = vld [vmem:[%s5 + $0xe0] sm:$0xff]
        %v633 = vld [vmem:[%s5 + $0xe8] sm:$0xff]
        %v634 = vld [vmem:[%s5 + $0xf0] sm:$0xff]
        %v635 = vld [vmem:[%s5 + $0xf8] sm:$0xff]
        %636 = vmatprep.subr.mxu0 0.0
        %637 = vmatpush1.msra.mxu0 %v620
        %638 = vmatprep.subr.mxu0 0.0
        %639 = vmatpush1.msra.mxu0 %v621
        %640 = vmatprep.subr.mxu0 0.0
        %641 = vmatpush1.msra.mxu0 %v622
        %642 = vmatprep.subr.mxu0 0.0
        %643 = vmatpush1.msra.mxu0 %v623
        %644 = vmatprep.subr.mxu0 0.0
        %645 = vmatpush1.msra.mxu0 %v624
        %646 = vmatprep.subr.mxu0 0.0
        %647 = vmatpush1.msra.mxu0 %v625
        %648 = vmatprep.subr.mxu0 0.0
        %649 = vmatpush1.msra.mxu0 %v626
        %650 = vmatprep.subr.mxu0 0.0
        %651 = vmatpush1.msra.mxu0 %v627
        %652 = vmatprep.subr.mxu0 0.0
        %653 = vmatpush1.msra.mxu0 %v628
        %654 = vmatprep.subr.mxu0 0.0
        %655 = vmatpush1.msra.mxu0 %v629
        %656 = vmatprep.subr.mxu0 0.0
        %657 = vmatpush1.msra.mxu0 %v630
        %658 = vmatprep.subr.mxu0 0.0
        %659 = vmatpush1.msra.mxu0 %v631
        %660 = vmatprep.subr.mxu0 0.0
        %661 = vmatpush1.msra.mxu0 %v632
        %662 = vmatprep.subr.mxu0 0.0
        %663 = vmatpush1.msra.mxu0 %v633
        %664 = vmatprep.subr.mxu0 0.0
        %665 = vmatpush1.msra.mxu0 %v634
        %666 = vmatprep.subr.mxu0 0.0
        %667 = vmatpush1.msra.mxu0 %v635
        %668 = vmatprep.subr.mxu0 0.0
        %669 = vmatpush1.msra.mxu0 0.0
        %670 = vmatprep.subr.mxu0 0.0
        %671 = vmatpush1.msra.mxu0 0.0
        %672 = vmatprep.subr.mxu0 0.0
        %673 = vmatpush1.msra.mxu0 0.0
        %674 = vmatprep.subr.mxu0 0.0
        %675 = vmatpush1.msra.mxu0 0.0
        %676 = vmatprep.subr.mxu0 0.0
        %677 = vmatpush1.msra.mxu0 0.0
        %678 = vmatprep.subr.mxu0 0.0
        %679 = vmatpush1.msra.mxu0 0.0
        %680 = vmatprep.subr.mxu0 0.0
        %681 = vmatpush1.msra.mxu0 0.0
        %682 = vmatprep.subr.mxu0 0.0
        %683 = vmatpush1.msra.mxu0 0.0
        %684 = vmatprep.subr.mxu0 0.0
        %685 = vmatpush1.msra.mxu0 0.0
        %686 = vmatprep.subr.mxu0 0.0
        %687 = vmatpush1.msra.mxu0 0.0
        %688 = vmatprep.subr.mxu0 0.0
        %689 = vmatpush1.msra.mxu0 0.0
        %690 = vmatprep.subr.mxu0 0.0
        %691 = vmatpush1.msra.mxu0 0.0
        %692 = vmatprep.subr.mxu0 0.0
        %693 = vmatpush1.msra.mxu0 0.0
        %694 = vmatprep.subr.mxu0 0.0
        %695 = vmatpush1.msra.mxu0 0.0
        %696 = vmatprep.subr.mxu0 0.0
        %697 = vmatpush1.msra.mxu0 0.0
        %698 = vmatprep.subr.mxu0 0.0
        %699 = vmatpush1.msra.mxu0 0.0
        %700 = vmatprep.mubr.f32.mxu0 0.0
        %701 = vmatmul.mubr.f32.gmra.mrb[0].mxu0 %v600
        %v702 = vpop.f32.mrb[0].mxu0
        %v703 = vadd.f32 0.0, %v702
        %v704 = vpop.f32.mrb[0].mxu0
        %705 = vmatprep.mubr.f32.mxu0 0.0
        %706 = vmatmul.mubr.f32.gmra.mrb[0].mxu0 %v601
        %v707 = vpop.f32.mrb[0].mxu0
        %v708 = vadd.f32 0.0, %v707
        %v709 = vpop.f32.mrb[0].mxu0
        %710 = vmatprep.mubr.f32.mxu0 0.0
        %711 = vmatmul.mubr.f32.gmra.mrb[0].mxu0 %v602
        %v712 = vpop.f32.mrb[0].mxu0
        %v713 = vadd.f32 0.0, %v712
        %v714 = vpop.f32.mrb[0].mxu0
        %715 = vmatprep.mubr.f32.mxu0 0.0
        %716 = vmatmul.mubr.f32.gmra.mrb[0].mxu0 %v603
        %v717 = vpop.f32.mrb[0].mxu0
        %v718 = vadd.f32 0.0, %v717
        %v719 = vpop.f32.mrb[0].mxu0
        %720 = vdwg.mxu0
        %721 = vmatprep.subr.mxu0 0.0
        %722 = vmatpush1.msra.mxu0 %v604
        %723 = vmatprep.subr.mxu0 0.0
        %724 = vmatpush1.msra.mxu0 %v605
        %725 = vmatprep.subr.mxu0 0.0
        %726 = vmatpush1.msra.mxu0 %v606
        %727 = vmatprep.subr.mxu0 0.0
        %728 = vmatpush1.msra.mxu0 %v607
        %729 = vmatprep.subr.mxu0 0.0
        %730 = vmatpush1.msra.mxu0 %v608
        %731 = vmatprep.subr.mxu0 0.0
        %732 = vmatpush1.msra.mxu0 %v609
        %733 = vmatprep.subr.mxu0 0.0
        %734 = vmatpush1.msra.mxu0 %v610
        %735 = vmatprep.subr.mxu0 0.0
        %736 = vmatpush1.msra.mxu0 %v611
        %737 = vmatprep.subr.mxu0 0.0
        %738 = vmatpush1.msra.mxu0 %v612
        %739 = vmatprep.subr.mxu0 0.0
        %740 = vmatpush1.msra.mxu0 %v613
        %741 = vmatprep.subr.mxu0 0.0
        %742 = vmatpush1.msra.mxu0 %v614
        %743 = vmatprep.subr.mxu0 0.0
        %744 = vmatpush1.msra.mxu0 %v615
        %745 = vmatprep.subr.mxu0 0.0
        %746 = vmatpush1.msra.mxu0 %v616
        %747 = vmatprep.subr.mxu0 0.0
        %748 = vmatpush1.msra.mxu0 %v617
        %749 = vmatprep.subr.mxu0 0.0
        %750 = vmatpush1.msra.mxu0 %v618
        %751 = vmatprep.subr.mxu0 0.0
        %752 = vmatpush1.msra.mxu0 %v619
        %753 = vmatprep.subr.mxu0 0.0
        %754 = vmatpush1.msra.mxu0 0.0
        %755 = vmatprep.subr.mxu0 0.0
        %756 = vmatpush1.msra.mxu0 0.0
        %757 = vmatprep.subr.mxu0 0.0
        %758 = vmatpush1.msra.mxu0 0.0
        %759 = vmatprep.subr.mxu0 0.0
        %760 = vmatpush1.msra.mxu0 0.0
        %761 = vmatprep.subr.mxu0 0.0
        %762 = vmatpush1.msra.mxu0 0.0
        %763 = vmatprep.subr.mxu0 0.0
        %764 = vmatpush1.msra.mxu0 0.0
        %765 = vmatprep.subr.mxu0 0.0
        %766 = vmatpush1.msra.mxu0 0.0
        %767 = vmatprep.subr.mxu0 0.0
        %768 = vmatpush1.msra.mxu0 0.0
        %769 = vmatprep.subr.mxu0 0.0
        %770 = vmatpush1.msra.mxu0 0.0
        %771 = vmatprep.subr.mxu0 0.0
        %772 = vmatpush1.msra.mxu0 0.0
        %773 = vmatprep.subr.mxu0 0.0
        %774 = vmatpush1.msra.mxu0 0.0
        %775 = vmatprep.subr.mxu0 0.0
        %776 = vmatpush1.msra.mxu0 0.0
        %777 = vmatprep.subr.mxu0 0.0
        %778 = vmatpush1.msra.mxu0 0.0
        %779 = vmatprep.subr.mxu0 0.0
        %780 = vmatpush1.msra.mxu0 0.0
        %781 = vmatprep.subr.mxu0 0.0
        %782 = vmatpush1.msra.mxu0 0.0
        %783 = vmatprep.subr.mxu0 0.0
        %784 = vmatpush1.msra.mxu0 0.0
        %785 = vmatprep.mubr.f32.mxu0 0.0
        %786 = vmatmul.mubr.f32.gmra.mrb[0].mxu0 %v487
        %v787 = vpop.f32.mrb[0].mxu0
        %v788 = vadd.f32 %v703, %v787
        %v789 = vpop.f32.mrb[0].mxu0
        %790 = vmatprep.mubr.f32.mxu0 0.0
        %791 = vmatmul.mubr.f32.gmra.mrb[0].mxu0 %v488
        %v792 = vpop.f32.mrb[0].mxu0
        %v793 = vadd.f32 %v708, %v792
        %v794 = vpop.f32.mrb[0].mxu0
        %795 = vmatprep.mubr.f32.mxu0 0.0
        %796 = vmatmul.mubr.f32.gmra.mrb[0].mxu0 %v489
        %v797 = vpop.f32.mrb[0].mxu0
        %v798 = vadd.f32 %v713, %v797
        %v799 = vpop.f32.mrb[0].mxu0
        %800 = vmatprep.mubr.f32.mxu0 0.0
        %801 = vmatmul.mubr.f32.gmra.mrb[0].mxu0 %v490
        %v802 = vpop.f32.mrb[0].mxu0
        %v803 = vadd.f32 %v718, %v802
        %v804 = vpop.f32.mrb[0].mxu0
        %805 = vdwg.mxu0
        %v806 = vld [vmem:[%s6] sm:$0x1]
        %v808 = vlaneseq
        %v809 = vshrl.u32 %v808, 7
        %v810 = vsub.s32 0, %v809
        %v811 = vrot.slane %v806, %v810
        %v813 = vadd.f32 %v788, %v811
        %v814 = vadd.f32 %v793, %v811
        %v815 = vadd.f32 %v798, %v811
        %v816 = vadd.f32 %v803, %v811
        %v817 = vld [vmem:[%s363] sm:$0xff]
        %v818 = vld [vmem:[%s363 + $0x8] sm:$0xff]
        %v819 = vld [vmem:[%s363 + $0x10] sm:$0xff]
        %v820 = vld [vmem:[%s363 + $0x18] sm:$0xff]
        %v821 = vld [vmem:[#allocation2] sm:$0xff]
        %v822 = vld [vmem:[#allocation2 + $0x8] sm:$0xff]
        %v823 = vld [vmem:[#allocation2 + $0x10] sm:$0xff]
        %v824 = vld [vmem:[#allocation2 + $0x18] sm:$0xff]
        %v826 = vsel %vm381, %v817, 0
        %v829 = vsel %vm381, %v818, 0
        %v832 = vsel %vm381, %v819, 0
        %v835 = vsel %vm381, %v820, 0
        %837 = vmatprep.subr.mxu0 0.0
        %838 = vmatpush1.msra.mxu0 %v821
        %839 = vmatprep.subr.mxu0 0.0
        %840 = vmatpush1.msra.mxu0 %v822
        %841 = vmatprep.subr.mxu0 0.0
        %842 = vmatpush1.msra.mxu0 %v823
        %843 = vmatprep.subr.mxu0 0.0
        %844 = vmatpush1.msra.mxu0 %v824
        %845 = vmatprep.subr.mxu0 0.0
        %846 = vmatpush1.msra.mxu0 0.0
        %847 = vmatprep.subr.mxu0 0.0
        %848 = vmatpush1.msra.mxu0 0.0
        %849 = vmatprep.subr.mxu0 0.0
        %850 = vmatpush1.msra.mxu0 0.0
        %851 = vmatprep.subr.mxu0 0.0
        %852 = vmatpush1.msra.mxu0 0.0
        %853 = vmatprep.subr.mxu0 0.0
        %854 = vmatpush1.msra.mxu0 0.0
        %855 = vmatprep.subr.mxu0 0.0
        %856 = vmatpush1.msra.mxu0 0.0
        %857 = vmatprep.subr.mxu0 0.0
        %858 = vmatpush1.msra.mxu0 0.0
        %859 = vmatprep.subr.mxu0 0.0
        %860 = vmatpush1.msra.mxu0 0.0
        %861 = vmatprep.subr.mxu0 0.0
        %862 = vmatpush1.msra.mxu0 0.0
        %863 = vmatprep.subr.mxu0 0.0
        %864 = vmatpush1.msra.mxu0 0.0
        %865 = vmatprep.subr.mxu0 0.0
        %866 = vmatpush1.msra.mxu0 0.0
        %867 = vmatprep.subr.mxu0 0.0
        %868 = vmatpush1.msra.mxu0 0.0
        %869 = vmatprep.subr.mxu0 0.0
        %870 = vmatpush1.msra.mxu0 0.0
        %871 = vmatprep.subr.mxu0 0.0
        %872 = vmatpush1.msra.mxu0 0.0
        %873 = vmatprep.subr.mxu0 0.0
        %874 = vmatpush1.msra.mxu0 0.0
        %875 = vmatprep.subr.mxu0 0.0
        %876 = vmatpush1.msra.mxu0 0.0
        %877 = vmatprep.subr.mxu0 0.0
        %878 = vmatpush1.msra.mxu0 0.0
        %879 = vmatprep.subr.mxu0 0.0
        %880 = vmatpush1.msra.mxu0 0.0
        %881 = vmatprep.subr.mxu0 0.0
        %882 = vmatpush1.msra.mxu0 0.0
        %883 = vmatprep.subr.mxu0 0.0
        %884 = vmatpush1.msra.mxu0 0.0
        %885 = vmatprep.subr.mxu0 0.0
        %886 = vmatpush1.msra.mxu0 0.0
        %887 = vmatprep.subr.mxu0 0.0
        %888 = vmatpush1.msra.mxu0 0.0
        %889 = vmatprep.subr.mxu0 0.0
        %890 = vmatpush1.msra.mxu0 0.0
        %891 = vmatprep.subr.mxu0 0.0
        %892 = vmatpush1.msra.mxu0 0.0
        %893 = vmatprep.subr.mxu0 0.0
        %894 = vmatpush1.msra.mxu0 0.0
        %895 = vmatprep.subr.mxu0 0.0
        %896 = vmatpush1.msra.mxu0 0.0
        %897 = vmatprep.subr.mxu0 0.0
        %898 = vmatpush1.msra.mxu0 0.0
        %899 = vmatprep.subr.mxu0 0.0
        %900 = vmatpush1.msra.mxu0 0.0
        %901 = vmatprep.mubr.f32.mxu0 0.0
        %902 = vmatmul.mubr.f32.gmra.mrb[0].mxu0 %v826
        %v903 = vpop.f32.mrb[0].mxu0
        %v904 = vadd.f32 %v813, %v903
        %v905 = vpop.f32.mrb[0].mxu0
        %906 = vmatprep.mubr.f32.mxu0 0.0
        %907 = vmatmul.mubr.f32.gmra.mrb[0].mxu0 %v829
        %v908 = vpop.f32.mrb[0].mxu0
        %v909 = vadd.f32 %v814, %v908
        %v910 = vpop.f32.mrb[0].mxu0
        %911 = vmatprep.mubr.f32.mxu0 0.0
        %912 = vmatmul.mubr.f32.gmra.mrb[0].mxu0 %v832
        %v913 = vpop.f32.mrb[0].mxu0
        %v914 = vadd.f32 %v815, %v913
        %v915 = vpop.f32.mrb[0].mxu0
        %916 = vmatprep.mubr.f32.mxu0 0.0
        %917 = vmatmul.mubr.f32.gmra.mrb[0].mxu0 %v835
        %v918 = vpop.f32.mrb[0].mxu0
        %v919 = vadd.f32 %v816, %v918
        %v920 = vpop.f32.mrb[0].mxu0
        %921 = vdwg.mxu0
        %922 = vst [vmem:[%s346] sm:$0xff] %v904
        %923 = vst [vmem:[%s346 + $0x8] sm:$0xff] %v909
        %924 = vst [vmem:[%s346 + $0x10] sm:$0xff] %v914
        %925 = vst [vmem:[%s346 + $0x18] sm:$0xff] %v919
        %s926 = sand.u32 %s214, 1
        %s927 = scalar_lea.sflag [#allocation4], %s926
        %s928 = sand.u32 %s214, 1
        %s929 = smul.addr %s928, 32
        %s930 = scalar_lea.vmem [#allocation5], %s929
        // Predicated region
        $region57: #{tpu_custom_call.1} parent=51 // pred_check
          %p931 = pneg %p224
        $region58: #{tpu_custom_call.1} parent=51 // pred_check_branch
          %933 = sbr.rel (%p931) target = $region60
        $region59: #{tpu_custom_call.1} parent=51 // pred_region
          %s934 = smul.u32 4, %s23
          %s936 = ssub.s32 512, 512
          %937 = vsyncadd %s927, %s936
          %s938 = smul.addr %s934, 128
          %s939 = scalar_lea.hbm %s8, %s938
          %s940 = sshll.u32 %s930, 4
          %s941 = int_to_ptr.vmem [resolvable:$true] %s940
          %946 = dma.vmem_to_hbm [thread:$0]  %s941, 512, %s939, %s927, 128, 128, 8
        $region60: #{tpu_custom_call.1} parent=51 // pred_fallthru
          _
      $region52: #{tpu_custom_call.1} parent=5 // pred_fallthru
        _
      %p947 = scmp.le.s32.totalorder 2, %s18
      // Predicated region
      $region61: #{tpu_custom_call.1} parent=5 // pred_check
        %p948 = pneg %p947
      $region62: #{tpu_custom_call.1} parent=5 // pred_check_branch
        %950 = sbr.rel (%p948) target = $region64
      $region63: #{tpu_custom_call.1} parent=5 // pred_region
        %s951 = ssub.s32 %s18, 2
        // Predicated region
        $region65: #{tpu_custom_call.1} parent=63 // pred_check
          %p952 = pneg %p230
        $region66: #{tpu_custom_call.1} parent=63 // pred_check_branch
          %954 = sbr.rel (%p952) target = $region68
        $region67: #{tpu_custom_call.1} parent=63 // pred_region
          %s955 = sand.u32 %s215, 1
          %s956 = scalar_lea.sflag [#allocation4], %s955
          %s957 = sand.u32 %s215, 1
          %s958 = smul.addr %s957, 32
          %s959 = scalar_lea.vmem [#allocation5], %s958
          %960 = dma.done %s956, 512
        $region68: #{tpu_custom_call.1} parent=63 // pred_fallthru
          _
      $region64: #{tpu_custom_call.1} parent=5 // pred_fallthru
        _
    $region6: #{tpu_custom_call.1} parent=1 // loop_footer
      %s22 = sadd.s32 1, %s18
    $region7: #{tpu_custom_call.1} parent=1 // loop_footer_branch
      %17 = sbr.rel target = $region3
    $region8: #{tpu_custom_call.1} parent=1 // loop_exit
      _
    %961 = vsyncpa [#allocation3], 1
    %s962 = scalar_lea.sflag [#allocation3], 1
    %963 = vsyncpa %s962, 1
    %964 = vsyncpa [#allocation4], 1
    %s965 = scalar_lea.sflag [#allocation4], 1
    %966 = vsyncpa %s965, 1

// kernel: tpu_custom_call.1
$region0: #{tpu_custom_call.1}
  #allocation0 [shape = 'u32[]', space=smem, size = 0x4, offset = 0x4, fixed_abs, tag = 'smem constant byte address 0x4 - core index']
  #allocation1 [shape = 'u32[144,128]{1,0:T(1,128)}', space=vmem, size = 0x12000, scoped, tag = 'internal scratch']
  %s0 = inlined_call_operand.vmem [shape: f32[64,32], index: 0, kind: input, shape index: {}]
  %s1 = inlined_call_operand.vmem [shape: f32[64,32], index: 1, kind: input, shape index: {}]
  %s2 = inlined_call_operand.vmem [shape: f32[64,32], index: 2, kind: input, shape index: {}]
  %s3 = inlined_call_operand.vmem [shape: f32[32,128], index: 3, kind: input, shape index: {}]
  %s4 = inlined_call_operand.vmem [shape: f32[1,128], index: 4, kind: input, shape index: {}]
  %s5 = inlined_call_operand.vmem [shape: f32[256,128], index: 5, kind: input, shape index: {}]
  %s6 = inlined_call_operand.vmem [shape: f32[1,128], index: 6, kind: input, shape index: {}]
  %s7 = inlined_call_operand.hbm [shape: f32[32,128], index: 7, kind: input, shape index: {}]
  %s8 = inlined_call_operand.hbm [shape: f32[64,128], index: 8, kind: output, shape index: {}]
  %s9 = sld [smem:[#allocation0]]
  $region69: #{tpu_custom_call.1} parent=0
    _
  %s11 = ssub.s32 1, %s9
  %s12 = scalar_select 0, %s11, %s9
  $region1: #{tpu_custom_call.1} parent=0
    #allocation2 [shape = 'u8[16384]{0}', space=vmem, size = 0x4000, scoped, tag = 'input window, operand 7, single buffered']
    #allocation3 [shape = 's32[2]{0}', space=sflag, size = 0x8, scoped, tag = 'scoped memory for tpu_custom_call.1']
    #allocation4 [shape = 's32[2]{0}', space=sflag, size = 0x8, scoped, tag = 'scoped memory for tpu_custom_call.1']
    #allocation5 [shape = 'u8[32768]{0}', space=vmem, size = 0x8000, scoped, tag = 'output window, operand 0']
    %13 = vsyncpa [#allocation3], 0
    %14 = vsyncpa [#allocation4], 0
    %s15 = scalar_lea.sflag [#allocation4], 1
    %16 = vsyncpa %s15, 0
    loop: start=0, step=1, limit=4
    $region2: #{tpu_custom_call.1} parent=1 // loop_pre_header
      _
    $region3: #{tpu_custom_call.1} parent=1 // loop_header
      %s18 = sphi 0, %s22
      %p19 = scmp.ge.s32.totalorder %s18, 4
      %s28 = sphi 0, %s30
      %s31 = sphi 0, %s28
      %s32 = sphi 0, %s31
      %s48 = sphi 0, %s32
      %s54 = sphi 0, %s56
      %s57 = sphi 0, %s54
      %s58 = sphi 0, %s57
      %s74 = sphi 0, %s58
      %s80 = sphi 0, %s82
      %s83 = sphi 0, %s80
      %s84 = sphi 0, %s83
      %s100 = sphi 0, %s84
      %s104 = sphi 0, %s104
      %s106 = sphi 0, %s104
      %s107 = sphi 0, %s106
      %s121 = sphi 0, %s107
      %s125 = sphi 0, %s125
      %s127 = sphi 0, %s125
      %s128 = sphi 0, %s127
      %s142 = sphi 0, %s128
      %s146 = sphi 0, %s146
      %s148 = sphi 0, %s146
      %s149 = sphi 0, %s148
      %s163 = sphi 0, %s149
      %s167 = sphi 0, %s167
      %s169 = sphi 0, %s167
      %s170 = sphi 0, %s169
      %s184 = sphi 0, %s170
      %s188 = sphi 0, %s188
      %s190 = sphi 0, %s188
      %s191 = sphi 0, %s190
      %s205 = sphi 0, %s191
      %s211 = sphi 0, %s213
      %s214 = sphi 0, %s211
      %s215 = sphi 0, %s214
      %s231 = sphi 0, %s215
    $region4: #{tpu_custom_call.1} parent=1 // loop_header_branch
      %21 = sbr.rel (%p19) target = $region8
    $region5: #{tpu_custom_call.1} parent=1 // loop_body
      %s23 = ssub.s32 %s18, 1
      %s24 = ssub.s32 %s18, 2
      %s25 = sadd.s32 %s18, 1
      %s26 = ssub.s32 %s18, %s25
      %p27 = scmp.eq.s32.totalorder %s26, 0
      %s29 = sadd.s32 %s28, 1
      %s30 = scalar_select %p27, %s28, %s29
      %p33 = pneg %p27
      %p34 = scmp.eq.s32.totalorder %s18, 1
      %p35 = por %p33, %p34
      %p36 = scmp.ne.s32.totalorder %s28, %s31
      %p37 = scmp.eq.s32.totalorder %s18, 0
      %p38 = por %p36, %p37
      %p39 = scmp.ne.s32.totalorder %s28, %s31
      %p40 = scmp.eq.s32.totalorder %s23, 1
      %p41 = por %p39, %p40
      %p42 = scmp.ne.s32.totalorder %s31, %s32
      %p43 = scmp.eq.s32.totalorder %s23, 0
      %p44 = por %p42, %p43
      %p45 = scmp.ne.s32.totalorder %s31, %s32
      %p46 = scmp.eq.s32.totalorder %s24, 1
      %p47 = por %p45, %p46
      %p49 = scmp.ne.s32.totalorder %s32, %s48
      %p50 = scmp.eq.s32.totalorder %s24, 0
      %p51 = por %p49, %p50
      %s52 = ssub.s32 %s18, %s25
      %p53 = scmp.eq.s32.totalorder %s52, 0
      %s55 = sadd.s32 %s54, 1
      %s56 = scalar_select %p53, %s54, %s55
      %p59 = pneg %p53
      %p60 = scmp.eq.s32.totalorder %s18, 1
      %p61 = por %p59, %p60
      %p62 = scmp.ne.s32.totalorder %s54, %s57
      %p63 = scmp.eq.s32.totalorder %s18, 0
      %p64 = por %p62, %p63
      %p65 = scmp.ne.s32.totalorder %s54, %s57
      %p66 = scmp.eq.s32.totalorder %s23, 1
      %p67 = por %p65, %p66
      %p68 = scmp.ne.s32.totalorder %s57, %s58
      %p69 = scmp.eq.s32.totalorder %s23, 0
      %p70 = por %p68, %p69
      %p71 = scmp.ne.s32.totalorder %s57, %s58
      %p72 = scmp.eq.s32.totalorder %s24, 1
      %p73 = por %p71, %p72
      %p75 = scmp.ne.s32.totalorder %s58, %s74
      %p76 = scmp.eq.s32.totalorder %s24, 0
      %p77 = por %p75, %p76
      %s78 = ssub.s32 %s18, %s25
      %p79 = scmp.eq.s32.totalorder %s78, 0
      %s81 = sadd.s32 %s80, 1
      %s82 = scalar_select %p79, %s80, %s81
      %p85 = pneg %p79
      %p86 = scmp.eq.s32.totalorder %s18, 1
      %p87 = por %p85, %p86
      %p88 = scmp.ne.s32.totalorder %s80, %s83
      %p89 = scmp.eq.s32.totalorder %s18, 0
      %p90 = por %p88, %p89
      %p91 = scmp.ne.s32.totalorder %s80, %s83
      %p92 = scmp.eq.s32.totalorder %s23, 1
      %p93 = por %p91, %p92
      %p94 = scmp.ne.s32.totalorder %s83, %s84
      %p95 = scmp.eq.s32.totalorder %s23, 0
      %p96 = por %p94, %p95
      %p97 = scmp.ne.s32.totalorder %s83, %s84
      %p98 = scmp.eq.s32.totalorder %s24, 1
      %p99 = por %p97, %p98
      %p101 = scmp.ne.s32.totalorder %s84, %s100
      %p102 = scmp.eq.s32.totalorder %s24, 0
      %p103 = por %p101, %p102
      %s105 = sadd.s32 %s104, 1
      %p108 = scmp.eq.s32.totalorder %s18, 1
      %p109 = scmp.ne.s32.totalorder %s104, %s106
      %p110 = scmp.eq.s32.totalorder %s18, 0
      %p111 = por %p109, %p110
      %p112 = scmp.ne.s32.totalorder %s104, %s106
      %p113 = scmp.eq.s32.totalorder %s23, 1
      %p114 = por %p112, %p113
      %p115 = scmp.ne.s32.totalorder %s106, %s107
      %p116 = scmp.eq.s32.totalorder %s23, 0
      %p117 = por %p115, %p116
      %p118 = scmp.ne.s32.totalorder %s106, %s107
      %p119 = scmp.eq.s32.totalorder %s24, 1
      %p120 = por %p118, %p119
      %p122 = scmp.ne.s32.totalorder %s107, %s121
      %p123 = scmp.eq.s32.totalorder %s24, 0
      %p124 = por %p122, %p123
      %s126 = sadd.s32 %s125, 1
      %p129 = scmp.eq.s32.totalorder %s18, 1
      %p130 = scmp.ne.s32.totalorder %s125, %s127
      %p131 = scmp.eq.s32.totalorder %s18, 0
      %p132 = por %p130, %p131
      %p133 = scmp.ne.s32.totalorder %s125, %s127
      %p134 = scmp.eq.s32.totalorder %s23, 1
      %p135 = por %p133, %p134
      %p136 = scmp.ne.s32.totalorder %s127, %s128
      %p137 = scmp.eq.s32.totalorder %s23, 0
      %p138 = por %p136, %p137
      %p139 = scmp.ne.s32.totalorder %s127, %s128
      %p140 = scmp.eq.s32.totalorder %s24, 1
      %p141 = por %p139, %p140
      %p143 = scmp.ne.s32.totalorder %s128, %s142
      %p144 = scmp.eq.s32.totalorder %s24, 0
      %p145 = por %p143, %p144
      %s147 = sadd.s32 %s146, 1
      %p150 = scmp.eq.s32.totalorder %s18, 1
      %p151 = scmp.ne.s32.totalorder %s146, %s148
      %p152 = scmp.eq.s32.totalorder %s18, 0
      %p153 = por %p151, %p152
      %p154 = scmp.ne.s32.totalorder %s146, %s148
      %p155 = scmp.eq.s32.totalorder %s23, 1
      %p156 = por %p154, %p155
      %p157 = scmp.ne.s32.totalorder %s148, %s149
      %p158 = scmp.eq.s32.totalorder %s23, 0
      %p159 = por %p157, %p158
      %p160 = scmp.ne.s32.totalorder %s148, %s149
      %p161 = scmp.eq.s32.totalorder %s24, 1
      %p162 = por %p160, %p161
      %p164 = scmp.ne.s32.totalorder %s149, %s163
      %p165 = scmp.eq.s32.totalorder %s24, 0
      %p166 = por %p164, %p165
      %s168 = sadd.s32 %s167, 1
      %p171 = scmp.eq.s32.totalorder %s18, 1
      %p172 = scmp.ne.s32.totalorder %s167, %s169
      %p173 = scmp.eq.s32.totalorder %s18, 0
      %p174 = por %p172, %p173
      %p175 = scmp.ne.s32.totalorder %s167, %s169
      %p176 = scmp.eq.s32.totalorder %s23, 1
      %p177 = por %p175, %p176
      %p178 = scmp.ne.s32.totalorder %s169, %s170
      %p179 = scmp.eq.s32.totalorder %s23, 0
      %p180 = por %p178, %p179
      %p181 = scmp.ne.s32.totalorder %s169, %s170
      %p182 = scmp.eq.s32.totalorder %s24, 1
      %p183 = por %p181, %p182
      %p185 = scmp.ne.s32.totalorder %s170, %s184
      %p186 = scmp.eq.s32.totalorder %s24, 0
      %p187 = por %p185, %p186
      %s189 = sadd.s32 %s188, 1
      %p192 = scmp.eq.s32.totalorder %s18, 1
      %p193 = scmp.ne.s32.totalorder %s188, %s190
      %p194 = scmp.eq.s32.totalorder %s18, 0
      %p195 = por %p193, %p194
      %p196 = scmp.ne.s32.totalorder %s188, %s190
      %p197 = scmp.eq.s32.totalorder %s23, 1
      %p198 = por %p196, %p197
      %p199 = scmp.ne.s32.totalorder %s190, %s191
      %p200 = scmp.eq.s32.totalorder %s23, 0
      %p201 = por %p199, %p200
      %p202 = scmp.ne.s32.totalorder %s190, %s191
      %p203 = scmp.eq.s32.totalorder %s24, 1
      %p204 = por %p202, %p203
      %p206 = scmp.ne.s32.totalorder %s191, %s205
      %p207 = scmp.eq.s32.totalorder %s24, 0
      %p208 = por %p206, %p207
      %s209 = ssub.s32 %s18, %s25
      %p210 = scmp.eq.s32.totalorder %s209, 0
      %s212 = sadd.s32 %s211, 1
      %s213 = scalar_select %p210, %s211, %s212
      %p216 = pneg %p210
      %p217 = scmp.eq.s32.totalorder %s18, 1
      %p218 = por %p216, %p217
      %p219 = scmp.ne.s32.totalorder %s211, %s214
      %p220 = scmp.eq.s32.totalorder %s18, 0
      %p221 = por %p219, %p220
      %p222 = scmp.ne.s32.totalorder %s211, %s214
      %p223 = scmp.eq.s32.totalorder %s23, 1
      %p224 = por %p222, %p223
      %p225 = scmp.ne.s32.totalorder %s214, %s215
      %p226 = scmp.eq.s32.totalorder %s23, 0
      %p227 = por %p225, %p226
      %p228 = scmp.ne.s32.totalorder %s214, %s215
      %p229 = scmp.eq.s32.totalorder %s24, 1
      %p230 = por %p228, %p229
      %p232 = scmp.ne.s32.totalorder %s215, %s231
      %p233 = scmp.eq.s32.totalorder %s24, 0
      %p234 = por %p232, %p233
      %p235 = scmp.le.s32.totalorder 1, %s18
      %p236 = scmp.lt.s32.totalorder %s18, 3
      %p237 = pnand %p235, %p236
      %p238 = pneg %p237
      // Predicated region
      $region9: #{tpu_custom_call.1} parent=5 // pred_check
        _
      $region10: #{tpu_custom_call.1} parent=5 // pred_check_branch
        %240 = sbr.rel (%p237) target = $region12
      $region11: #{tpu_custom_call.1} parent=5 // pred_region
        %s241 = ssub.s32 %s18, 1
        // Predicated region
        $region13: #{tpu_custom_call.1} parent=11 // pred_check
          %p242 = pneg %p117
        $region14: #{tpu_custom_call.1} parent=11 // pred_check_branch
          %244 = sbr.rel (%p242) target = $region16
        $region15: #{tpu_custom_call.1} parent=11 // pred_region
          _
        $region16: #{tpu_custom_call.1} parent=11 // pred_fallthru
          _
        // Predicated region
        $region17: #{tpu_custom_call.1} parent=11 // pred_check
          %p245 = pneg %p138
        $region18: #{tpu_custom_call.1} parent=11 // pred_check_branch
          %247 = sbr.rel (%p245) target = $region20
        $region19: #{tpu_custom_call.1} parent=11 // pred_region
          _
        $region20: #{tpu_custom_call.1} parent=11 // pred_fallthru
          _
        // Predicated region
        $region21: #{tpu_custom_call.1} parent=11 // pred_check
          %p248 = pneg %p159
        $region22: #{tpu_custom_call.1} parent=11 // pred_check_branch
          %250 = sbr.rel (%p248) target = $region24
        $region23: #{tpu_custom_call.1} parent=11 // pred_region
          _
        $region24: #{tpu_custom_call.1} parent=11 // pred_fallthru
          _
        // Predicated region
        $region25: #{tpu_custom_call.1} parent=11 // pred_check
          %p251 = pneg %p180
        $region26: #{tpu_custom_call.1} parent=11 // pred_check_branch
          %253 = sbr.rel (%p251) target = $region28
        $region27: #{tpu_custom_call.1} parent=11 // pred_region
          _
        $region28: #{tpu_custom_call.1} parent=11 // pred_fallthru
          _
        // Predicated region
        $region29: #{tpu_custom_call.1} parent=11 // pred_check
          %p254 = pneg %p201
        $region30: #{tpu_custom_call.1} parent=11 // pred_check_branch
          %256 = sbr.rel (%p254) target = $region32
        $region31: #{tpu_custom_call.1} parent=11 // pred_region
          %s258 = ssub.s32 512, 512
          %259 = vsyncadd [#allocation3], %s258
          %s260 = sshll.u32 [#allocation2], 4
          %s261 = int_to_ptr.vmem [resolvable:$true] %s260
          %266 = dma.hbm_to_vmem [thread:$0]  %s7, 512, %s261, [#allocation3], 128, 128, 8
        $region32: #{tpu_custom_call.1} parent=11 // pred_fallthru
          _
      $region12: #{tpu_custom_call.1} parent=5 // pred_fallthru
        _
      %p267 = scmp.lt.s32.totalorder %s18, 2
      // Predicated region
      $region33: #{tpu_custom_call.1} parent=5 // pred_check
        %p268 = pneg %p267
      $region34: #{tpu_custom_call.1} parent=5 // pred_check_branch
        %270 = sbr.rel (%p268) target = $region36
      $region35: #{tpu_custom_call.1} parent=5 // pred_region
        // Predicated region
        $region37: #{tpu_custom_call.1} parent=35 // pred_check
          %p271 = pneg %p38
        $region38: #{tpu_custom_call.1} parent=35 // pred_check_branch
          %273 = sbr.rel (%p271) target = $region40
        $region39: #{tpu_custom_call.1} parent=35 // pred_region
          %s274 = smul.u32 4, %s18
          %p275 = scmp.lt.s32.totalorder %s274, 7
          %s276 = scalar_select %p275, %s274, 7
          %s277 = smul.addr %s276, 8
          %s278 = scalar_lea.vmem %s0, %s277
          %s279 = smul.u32 4, %s18
        $region40: #{tpu_custom_call.1} parent=35 // pred_fallthru
          _
        // Predicated region
        $region41: #{tpu_custom_call.1} parent=35 // pred_check
          %p280 = pneg %p64
        $region42: #{tpu_custom_call.1} parent=35 // pred_check_branch
          %282 = sbr.rel (%p280) target = $region44
        $region43: #{tpu_custom_call.1} parent=35 // pred_region
          %s283 = smul.u32 4, %s18
          %p284 = scmp.lt.s32.totalorder %s283, 7
          %s285 = scalar_select %p284, %s283, 7
          %s286 = smul.addr %s285, 8
          %s287 = scalar_lea.vmem %s1, %s286
          %s288 = smul.u32 4, %s18
        $region44: #{tpu_custom_call.1} parent=35 // pred_fallthru
          _
        // Predicated region
        $region45: #{tpu_custom_call.1} parent=35 // pred_check
          %p289 = pneg %p90
        $region46: #{tpu_custom_call.1} parent=35 // pred_check_branch
          %291 = sbr.rel (%p289) target = $region48
        $region47: #{tpu_custom_call.1} parent=35 // pred_region
          %s292 = smul.u32 4, %s18
          %p293 = scmp.lt.s32.totalorder %s292, 7
          %s294 = scalar_select %p293, %s292, 7
          %s295 = smul.addr %s294, 8
          %s296 = scalar_lea.vmem %s2, %s295
          %s297 = smul.u32 4, %s18
        $region48: #{tpu_custom_call.1} parent=35 // pred_fallthru
          _
      $region36: #{tpu_custom_call.1} parent=5 // pred_fallthru
        _
      %p298 = scmp.le.s32.totalorder 1, %s18
      %p299 = scmp.lt.s32.totalorder %s18, 3
      %p300 = pnand %p298, %p299
      %p301 = pneg %p300
      // Predicated region
      $region49: #{tpu_custom_call.1} parent=5 // pred_check
        _
      $region50: #{tpu_custom_call.1} parent=5 // pred_check_branch
        %303 = sbr.rel (%p300) target = $region52
      $region51: #{tpu_custom_call.1} parent=5 // pred_region
        %s304 = ssub.s32 %s18, 1
        // Predicated region
        $region53: #{tpu_custom_call.1} parent=51 // pred_check
          %p305 = pneg %p201
        $region54: #{tpu_custom_call.1} parent=51 // pred_check_branch
          %307 = sbr.rel (%p305) target = $region56
        $region55: #{tpu_custom_call.1} parent=51 // pred_region
          %308 = dma.done [#allocation3], 512
        $region56: #{tpu_custom_call.1} parent=51 // pred_fallthru
          _
        %s309 = smul.u32 4, %s23
        %p310 = scmp.lt.s32.totalorder %s309, 7
        %s311 = scalar_select %p310, %s309, 7
        %s312 = smul.addr %s311, 8
        %s313 = scalar_lea.vmem %s0, %s312
        %p314 = pneg %p44
        %p315 = pneg %p41
        %s316 = smul.u32 4, %s23
        %p317 = scmp.lt.s32.totalorder %s316, 7
        %s318 = scalar_select %p317, %s316, 7
        %s319 = smul.addr %s318, 8
        %s320 = scalar_lea.vmem %s1, %s319
        %p321 = pneg %p70
        %p322 = pneg %p67
        %s323 = smul.u32 4, %s23
        %p324 = scmp.lt.s32.totalorder %s323, 7
        %s325 = scalar_select %p324, %s323, 7
        %s326 = smul.addr %s325, 8
        %s327 = scalar_lea.vmem %s2, %s326
        %p328 = pneg %p96
        %p329 = pneg %p93
        %p330 = pneg %p117
        %p331 = pneg %p114
        %p332 = pneg %p138
        %p333 = pneg %p135
        %p334 = pneg %p159
        %p335 = pneg %p156
        %p336 = pneg %p180
        %p337 = pneg %p177
        %p338 = pneg %p201
        %p339 = pneg %p198
        %p340 = pneg %p227
        %p341 = pneg %p224
        %s342 = sand.u32 %s214, 1
        %s343 = scalar_lea.sflag [#allocation4], %s342
        %s344 = sand.u32 %s214, 1
        %s345 = smul.addr %s344, 32
        %s346 = scalar_lea.vmem [#allocation5], %s345
        %s347 = smul.u32 4, %s23
        %p348 = scmp.lt.s32.totalorder %s347, 7
        %s349 = scalar_select %p348, %s347, 7
        %s350 = smul.addr %s349, 8
        %s351 = scalar_lea.vmem %s0, %s350
        %s352 = smul.u32 4, %s23
        %s353 = smul.u32 4, %s23
        %p354 = scmp.lt.s32.totalorder %s353, 7
        %s355 = scalar_select %p354, %s353, 7
        %s356 = smul.addr %s355, 8
        %s357 = scalar_lea.vmem %s1, %s356
        %s358 = smul.u32 4, %s23
        %s359 = smul.u32 4, %s23
        %p360 = scmp.lt.s32.totalorder %s359, 7
        %s361 = scalar_select %p360, %s359, 7
        %s362 = smul.addr %s361, 8
        %s363 = scalar_lea.vmem %s2, %s362
        %s364 = smul.u32 4, %s23
        %s365 = smul.u32 4, %s23
        %v366 = vld [vmem:[%s351] sm:$0xff]
        %v367 = vld [vmem:[%s351 + $0x8] sm:$0xff]
        %v368 = vld [vmem:[%s351 + $0x10] sm:$0xff]
        %v369 = vld [vmem:[%s351 + $0x18] sm:$0xff]
        %v370 = vld [vmem:[%s3] sm:$0xff]
        %v371 = vld [vmem:[%s3 + $0x8] sm:$0xff]
        %v372 = vld [vmem:[%s3 + $0x10] sm:$0xff]
        %v373 = vld [vmem:[%s3 + $0x18] sm:$0xff]
        %v374 = vld [vmem:[%s4] sm:$0x1]
        %v376 = vlaneseq
        %v377 = vshrl.u32 %v376, 7
        %v378 = vsub.s32 0, %v377
        %v379 = vrot.slane %v374, %v378
        %vm381 = vcmask 261120
        %v383 = vsel %vm381, %v366, 0
        %v386 = vsel %vm381, %v367, 0
        %v389 = vsel %vm381, %v368, 0
        %v392 = vsel %vm381, %v369, 0
        %394 = vmatprep.subr.mxu0 0.0
        %395 = vmatpush1.msra.mxu0 %v370
        %396 = vmatprep.subr.mxu0 0.0
        %397 = vmatpush1.msra.mxu0 %v371
        %398 = vmatprep.subr.mxu0 0.0
        %399 = vmatpush1.msra.mxu0 %v372
        %400 = vmatprep.subr.mxu0 0.0
        %401 = vmatpush1.msra.mxu0 %v373
        %402 = vmatprep.subr.mxu0 0.0
        %403 = vmatpush1.msra.mxu0 0.0
        %404 = vmatprep.subr.mxu0 0.0
        %405 = vmatpush1.msra.mxu0 0.0
        %406 = vmatprep.subr.mxu0 0.0
        %407 = vmatpush1.msra.mxu0 0.0
        %408 = vmatprep.subr.mxu0 0.0
        %409 = vmatpush1.msra.mxu0 0.0
        %410 = vmatprep.subr.mxu0 0.0
        %411 = vmatpush1.msra.mxu0 0.0
        %412 = vmatprep.subr.mxu0 0.0
        %413 = vmatpush1.msra.mxu0 0.0
        %414 = vmatprep.subr.mxu0 0.0
        %415 = vmatpush1.msra.mxu0 0.0
        %416 = vmatprep.subr.mxu0 0.0
        %417 = vmatpush1.msra.mxu0 0.0
        %418 = vmatprep.subr.mxu0 0.0
        %419 = vmatpush1.msra.mxu0 0.0
        %420 = vmatprep.subr.mxu0 0.0
        %421 = vmatpush1.msra.mxu0 0.0
        %422 = vmatprep.subr.mxu0 0.0
        %423 = vmatpush1.msra.mxu0 0.0
        %424 = vmatprep.subr.mxu0 0.0
        %425 = vmatpush1.msra.mxu0 0.0
        %426 = vmatprep.subr.mxu0 0.0
        %427 = vmatpush1.msra.mxu0 0.0
        %428 = vmatprep.subr.mxu0 0.0
        %429 = vmatpush1.msra.mxu0 0.0
        %430 = vmatprep.subr.mxu0 0.0
        %431 = vmatpush1.msra.mxu0 0.0
        %432 = vmatprep.subr.mxu0 0.0
        %433 = vmatpush1.msra.mxu0 0.0
        %434 = vmatprep.subr.mxu0 0.0
        %435 = vmatpush1.msra.mxu0 0.0
        %436 = vmatprep.subr.mxu0 0.0
        %437 = vmatpush1.msra.mxu0 0.0
        %438 = vmatprep.subr.mxu0 0.0
        %439 = vmatpush1.msra.mxu0 0.0
        %440 = vmatprep.subr.mxu0 0.0
        %441 = vmatpush1.msra.mxu0 0.0
        %442 = vmatprep.subr.mxu0 0.0
        %443 = vmatpush1.msra.mxu0 0.0
        %444 = vmatprep.subr.mxu0 0.0
        %445 = vmatpush1.msra.mxu0 0.0
        %446 = vmatprep.subr.mxu0 0.0
        %447 = vmatpush1.msra.mxu0 0.0
        %448 = vmatprep.subr.mxu0 0.0
        %449 = vmatpush1.msra.mxu0 0.0
        %450 = vmatprep.subr.mxu0 0.0
        %451 = vmatpush1.msra.mxu0 0.0
        %452 = vmatprep.subr.mxu0 0.0
        %453 = vmatpush1.msra.mxu0 0.0
        %454 = vmatprep.subr.mxu0 0.0
        %455 = vmatpush1.msra.mxu0 0.0
        %456 = vmatprep.subr.mxu0 0.0
        %457 = vmatpush1.msra.mxu0 0.0
        %458 = vmatprep.mubr.f32.mxu0 0.0
        %459 = vmatmul.mubr.f32.gmra.mrb[0].mxu0 %v383
        %v460 = vpop.f32.mrb[0].mxu0
        %v461 = vadd.f32 %v379, %v460
        %v462 = vpop.f32.mrb[0].mxu0
        %463 = vmatprep.mubr.f32.mxu0 0.0
        %464 = vmatmul.mubr.f32.gmra.mrb[0].mxu0 %v386
        %v465 = vpop.f32.mrb[0].mxu0
        %v466 = vadd.f32 %v379, %v465
        %v467 = vpop.f32.mrb[0].mxu0
        %468 = vmatprep.mubr.f32.mxu0 0.0
        %469 = vmatmul.mubr.f32.gmra.mrb[0].mxu0 %v389
        %v470 = vpop.f32.mrb[0].mxu0
        %v471 = vadd.f32 %v379, %v470
        %v472 = vpop.f32.mrb[0].mxu0
        %473 = vmatprep.mubr.f32.mxu0 0.0
        %474 = vmatmul.mubr.f32.gmra.mrb[0].mxu0 %v392
        %v475 = vpop.f32.mrb[0].mxu0
        %v476 = vadd.f32 %v379, %v475
        %v477 = vpop.f32.mrb[0].mxu0
        %478 = vdwg.mxu0
        %vm479 = vcmp.gt.f32.partialorder %v461, 0.0
        %vm480 = vcmp.gt.f32.partialorder %v466, 0.0
        %vm481 = vcmp.gt.f32.partialorder %v471, 0.0
        %vm482 = vcmp.gt.f32.partialorder %v476, 0.0
        %v483 = vmul.f32 %v461, 0.01
        %v484 = vmul.f32 %v466, 0.01
        %v485 = vmul.f32 %v471, 0.01
        %v486 = vmul.f32 %v476, 0.01
        %v487 = vsel %vm479, %v461, %v483
        %v488 = vsel %vm480, %v466, %v484
        %v489 = vsel %vm481, %v471, %v485
        %v490 = vsel %vm482, %v476, %v486
        %v491 = vld [vmem:[%s357] sm:$0xff]
        %v492 = vld [vmem:[%s357 + $0x8] sm:$0xff]
        %v493 = vld [vmem:[%s357 + $0x10] sm:$0xff]
        %v494 = vld [vmem:[%s357 + $0x18] sm:$0xff]
        %v496 = vsel %vm381, %v491, 0
        %v499 = vsel %vm381, %v492, 0
        %v502 = vsel %vm381, %v493, 0
        %v505 = vsel %vm381, %v494, 0
        %507 = vmatprep.subr.mxu0 0.0
        %508 = vmatpush1.msra.mxu0 %v370
        %509 = vmatprep.subr.mxu0 0.0
        %510 = vmatpush1.msra.mxu0 %v371
        %511 = vmatprep.subr.mxu0 0.0
        %512 = vmatpush1.msra.mxu0 %v372
        %513 = vmatprep.subr.mxu0 0.0
        %514 = vmatpush1.msra.mxu0 %v373
        %515 = vmatprep.subr.mxu0 0.0
        %516 = vmatpush1.msra.mxu0 0.0
        %517 = vmatprep.subr.mxu0 0.0
        %518 = vmatpush1.msra.mxu0 0.0
        %519 = vmatprep.subr.mxu0 0.0
        %520 = vmatpush1.msra.mxu0 0.0
        %521 = vmatprep.subr.mxu0 0.0
        %522 = vmatpush1.msra.mxu0 0.0
        %523 = vmatprep.subr.mxu0 0.0
        %524 = vmatpush1.msra.mxu0 0.0
        %525 = vmatprep.subr.mxu0 0.0
        %526 = vmatpush1.msra.mxu0 0.0
        %527 = vmatprep.subr.mxu0 0.0
        %528 = vmatpush1.msra.mxu0 0.0
        %529 = vmatprep.subr.mxu0 0.0
        %530 = vmatpush1.msra.mxu0 0.0
        %531 = vmatprep.subr.mxu0 0.0
        %532 = vmatpush1.msra.mxu0 0.0
        %533 = vmatprep.subr.mxu0 0.0
        %534 = vmatpush1.msra.mxu0 0.0
        %535 = vmatprep.subr.mxu0 0.0
        %536 = vmatpush1.msra.mxu0 0.0
        %537 = vmatprep.subr.mxu0 0.0
        %538 = vmatpush1.msra.mxu0 0.0
        %539 = vmatprep.subr.mxu0 0.0
        %540 = vmatpush1.msra.mxu0 0.0
        %541 = vmatprep.subr.mxu0 0.0
        %542 = vmatpush1.msra.mxu0 0.0
        %543 = vmatprep.subr.mxu0 0.0
        %544 = vmatpush1.msra.mxu0 0.0
        %545 = vmatprep.subr.mxu0 0.0
        %546 = vmatpush1.msra.mxu0 0.0
        %547 = vmatprep.subr.mxu0 0.0
        %548 = vmatpush1.msra.mxu0 0.0
        %549 = vmatprep.subr.mxu0 0.0
        %550 = vmatpush1.msra.mxu0 0.0
        %551 = vmatprep.subr.mxu0 0.0
        %552 = vmatpush1.msra.mxu0 0.0
        %553 = vmatprep.subr.mxu0 0.0
        %554 = vmatpush1.msra.mxu0 0.0
        %555 = vmatprep.subr.mxu0 0.0
        %556 = vmatpush1.msra.mxu0 0.0
        %557 = vmatprep.subr.mxu0 0.0
        %558 = vmatpush1.msra.mxu0 0.0
        %559 = vmatprep.subr.mxu0 0.0
        %560 = vmatpush1.msra.mxu0 0.0
        %561 = vmatprep.subr.mxu0 0.0
        %562 = vmatpush1.msra.mxu0 0.0
        %563 = vmatprep.subr.mxu0 0.0
        %564 = vmatpush1.msra.mxu0 0.0
        %565 = vmatprep.subr.mxu0 0.0
        %566 = vmatpush1.msra.mxu0 0.0
        %567 = vmatprep.subr.mxu0 0.0
        %568 = vmatpush1.msra.mxu0 0.0
        %569 = vmatprep.subr.mxu0 0.0
        %570 = vmatpush1.msra.mxu0 0.0
        %571 = vmatprep.mubr.f32.mxu0 0.0
        %572 = vmatmul.mubr.f32.gmra.mrb[0].mxu0 %v496
        %v573 = vpop.f32.mrb[0].mxu0
        %v574 = vadd.f32 %v379, %v573
        %v575 = vpop.f32.mrb[0].mxu0
        %576 = vmatprep.mubr.f32.mxu0 0.0
        %577 = vmatmul.mubr.f32.gmra.mrb[0].mxu0 %v499
        %v578 = vpop.f32.mrb[0].mxu0
        %v579 = vadd.f32 %v379, %v578
        %v580 = vpop.f32.mrb[0].mxu0
        %581 = vmatprep.mubr.f32.mxu0 0.0
        %582 = vmatmul.mubr.f32.gmra.mrb[0].mxu0 %v502
        %v583 = vpop.f32.mrb[0].mxu0
        %v584 = vadd.f32 %v379, %v583
        %v585 = vpop.f32.mrb[0].mxu0
        %586 = vmatprep.mubr.f32.mxu0 0.0
        %587 = vmatmul.mubr.f32.gmra.mrb[0].mxu0 %v505
        %v588 = vpop.f32.mrb[0].mxu0
        %v589 = vadd.f32 %v379, %v588
        %v590 = vpop.f32.mrb[0].mxu0
        %591 = vdwg.mxu0
        %vm592 = vcmp.gt.f32.partialorder %v574, 0.0
        %vm593 = vcmp.gt.f32.partialorder %v579, 0.0
        %vm594 = vcmp.gt.f32.partialorder %v584, 0.0
        %vm595 = vcmp.gt.f32.partialorder %v589, 0.0
        %v596 = vmul.f32 %v574, 0.01
        %v597 = vmul.f32 %v579, 0.01
        %v598 = vmul.f32 %v584, 0.01
        %v599 = vmul.f32 %v589, 0.01
        %v600 = vsel %vm592, %v574, %v596
        %v601 = vsel %vm593, %v579, %v597
        %v602 = vsel %vm594, %v584, %v598
        %v603 = vsel %vm595, %v589, %v599
        %v604 = vld [vmem:[%s5] sm:$0xff]
        %v605 = vld [vmem:[%s5 + $0x8] sm:$0xff]
        %v606 = vld [vmem:[%s5 + $0x10] sm:$0xff]
        %v607 = vld [vmem:[%s5 + $0x18] sm:$0xff]
        %v608 = vld [vmem:[%s5 + $0x20] sm:$0xff]
        %v609 = vld [vmem:[%s5 + $0x28] sm:$0xff]
        %v610 = vld [vmem:[%s5 + $0x30] sm:$0xff]
        %v611 = vld [vmem:[%s5 + $0x38] sm:$0xff]
        %v612 = vld [vmem:[%s5 + $0x40] sm:$0xff]
        %v613 = vld [vmem:[%s5 + $0x48] sm:$0xff]
        %v614 = vld [vmem:[%s5 + $0x50] sm:$0xff]
        %v615 = vld [vmem:[%s5 + $0x58] sm:$0xff]
        %v616 = vld [vmem:[%s5 + $0x60] sm:$0xff]
        %v617 = vld [vmem:[%s5 + $0x68] sm:$0xff]
        %v618 = vld [vmem:[%s5 + $0x70] sm:$0xff]
        %v619 = vld [vmem:[%s5 + $0x78] sm:$0xff]
        %v620 = vld [vmem:[%s5 + $0x80] sm:$0xff]
        %v621 = vld [vmem:[%s5 + $0x88] sm:$0xff]
        %v622 = vld [vmem:[%s5 + $0x90] sm:$0xff]
        %v623 = vld [vmem:[%s5 + $0x98] sm:$0xff]
        %v624 = vld [vmem:[%s5 + $0xa0] sm:$0xff]
        %v625 = vld [vmem:[%s5 + $0xa8] sm:$0xff]
        %v626 = vld [vmem:[%s5 + $0xb0] sm:$0xff]
        %v627 = vld [vmem:[%s5 + $0xb8] sm:$0xff]
        %v628 = vld [vmem:[%s5 + $0xc0] sm:$0xff]
        %v629 = vld [vmem:[%s5 + $0xc8] sm:$0xff]
        %v630 = vld [vmem:[%s5 + $0xd0] sm:$0xff]
        %v631 = vld [vmem:[%s5 + $0xd8] sm:$0xff]
        %v632 = vld [vmem:[%s5 + $0xe0] sm:$0xff]
        %v633 = vld [vmem:[%s5 + $0xe8] sm:$0xff]
        %v634 = vld [vmem:[%s5 + $0xf0] sm:$0xff]
        %v635 = vld [vmem:[%s5 + $0xf8] sm:$0xff]
        %636 = vmatprep.subr.mxu0 0.0
        %637 = vmatpush1.msra.mxu0 %v620
        %638 = vmatprep.subr.mxu0 0.0
        %639 = vmatpush1.msra.mxu0 %v621
        %640 = vmatprep.subr.mxu0 0.0
        %641 = vmatpush1.msra.mxu0 %v622
        %642 = vmatprep.subr.mxu0 0.0
        %643 = vmatpush1.msra.mxu0 %v623
        %644 = vmatprep.subr.mxu0 0.0
        %645 = vmatpush1.msra.mxu0 %v624
        %646 = vmatprep.subr.mxu0 0.0
        %647 = vmatpush1.msra.mxu0 %v625
        %648 = vmatprep.subr.mxu0 0.0
        %649 = vmatpush1.msra.mxu0 %v626
        %650 = vmatprep.subr.mxu0 0.0
        %651 = vmatpush1.msra.mxu0 %v627
        %652 = vmatprep.subr.mxu0 0.0
        %653 = vmatpush1.msra.mxu0 %v628
        %654 = vmatprep.subr.mxu0 0.0
        %655 = vmatpush1.msra.mxu0 %v629
        %656 = vmatprep.subr.mxu0 0.0
        %657 = vmatpush1.msra.mxu0 %v630
        %658 = vmatprep.subr.mxu0 0.0
        %659 = vmatpush1.msra.mxu0 %v631
        %660 = vmatprep.subr.mxu0 0.0
        %661 = vmatpush1.msra.mxu0 %v632
        %662 = vmatprep.subr.mxu0 0.0
        %663 = vmatpush1.msra.mxu0 %v633
        %664 = vmatprep.subr.mxu0 0.0
        %665 = vmatpush1.msra.mxu0 %v634
        %666 = vmatprep.subr.mxu0 0.0
        %667 = vmatpush1.msra.mxu0 %v635
        %668 = vmatprep.subr.mxu0 0.0
        %669 = vmatpush1.msra.mxu0 0.0
        %670 = vmatprep.subr.mxu0 0.0
        %671 = vmatpush1.msra.mxu0 0.0
        %672 = vmatprep.subr.mxu0 0.0
        %673 = vmatpush1.msra.mxu0 0.0
        %674 = vmatprep.subr.mxu0 0.0
        %675 = vmatpush1.msra.mxu0 0.0
        %676 = vmatprep.subr.mxu0 0.0
        %677 = vmatpush1.msra.mxu0 0.0
        %678 = vmatprep.subr.mxu0 0.0
        %679 = vmatpush1.msra.mxu0 0.0
        %680 = vmatprep.subr.mxu0 0.0
        %681 = vmatpush1.msra.mxu0 0.0
        %682 = vmatprep.subr.mxu0 0.0
        %683 = vmatpush1.msra.mxu0 0.0
        %684 = vmatprep.subr.mxu0 0.0
        %685 = vmatpush1.msra.mxu0 0.0
        %686 = vmatprep.subr.mxu0 0.0
        %687 = vmatpush1.msra.mxu0 0.0
        %688 = vmatprep.subr.mxu0 0.0
        %689 = vmatpush1.msra.mxu0 0.0
        %690 = vmatprep.subr.mxu0 0.0
        %691 = vmatpush1.msra.mxu0 0.0
        %692 = vmatprep.subr.mxu0 0.0
        %693 = vmatpush1.msra.mxu0 0.0
        %694 = vmatprep.subr.mxu0 0.0
        %695 = vmatpush1.msra.mxu0 0.0
        %696 = vmatprep.subr.mxu0 0.0
        %697 = vmatpush1.msra.mxu0 0.0
        %698 = vmatprep.subr.mxu0 0.0
        %699 = vmatpush1.msra.mxu0 0.0
        %700 = vmatprep.mubr.f32.mxu0 0.0
        %701 = vmatmul.mubr.f32.gmra.mrb[0].mxu0 %v600
        %v702 = vpop.f32.mrb[0].mxu0
        %v703 = vadd.f32 0.0, %v702
        %v704 = vpop.f32.mrb[0].mxu0
        %705 = vmatprep.mubr.f32.mxu0 0.0
        %706 = vmatmul.mubr.f32.gmra.mrb[0].mxu0 %v601
        %v707 = vpop.f32.mrb[0].mxu0
        %v708 = vadd.f32 0.0, %v707
        %v709 = vpop.f32.mrb[0].mxu0
        %710 = vmatprep.mubr.f32.mxu0 0.0
        %711 = vmatmul.mubr.f32.gmra.mrb[0].mxu0 %v602
        %v712 = vpop.f32.mrb[0].mxu0
        %v713 = vadd.f32 0.0, %v712
        %v714 = vpop.f32.mrb[0].mxu0
        %715 = vmatprep.mubr.f32.mxu0 0.0
        %716 = vmatmul.mubr.f32.gmra.mrb[0].mxu0 %v603
        %v717 = vpop.f32.mrb[0].mxu0
        %v718 = vadd.f32 0.0, %v717
        %v719 = vpop.f32.mrb[0].mxu0
        %720 = vdwg.mxu0
        %721 = vmatprep.subr.mxu0 0.0
        %722 = vmatpush1.msra.mxu0 %v604
        %723 = vmatprep.subr.mxu0 0.0
        %724 = vmatpush1.msra.mxu0 %v605
        %725 = vmatprep.subr.mxu0 0.0
        %726 = vmatpush1.msra.mxu0 %v606
        %727 = vmatprep.subr.mxu0 0.0
        %728 = vmatpush1.msra.mxu0 %v607
        %729 = vmatprep.subr.mxu0 0.0
        %730 = vmatpush1.msra.mxu0 %v608
        %731 = vmatprep.subr.mxu0 0.0
        %732 = vmatpush1.msra.mxu0 %v609
        %733 = vmatprep.subr.mxu0 0.0
        %734 = vmatpush1.msra.mxu0 %v610
        %735 = vmatprep.subr.mxu0 0.0
        %736 = vmatpush1.msra.mxu0 %v611
        %737 = vmatprep.subr.mxu0 0.0
        %738 = vmatpush1.msra.mxu0 %v612
        %739 = vmatprep.subr.mxu0 0.0
        %740 = vmatpush1.msra.mxu0 %v613
        %741 = vmatprep.subr.mxu0 0.0
        %742 = vmatpush1.msra.mxu0 %v614
        %743 = vmatprep.subr.mxu0 0.0
        %744 = vmatpush1.msra.mxu0 %v615
        %745 = vmatprep.subr.mxu0 0.0
        %746 = vmatpush1.msra.mxu0 %v616
        %747 = vmatprep.subr.mxu0 0.0
        %748 = vmatpush1.msra.mxu0 %v617
        %749 = vmatprep.subr.mxu0 0.0
        %750 = vmatpush1.msra.mxu0 %v618
        %751 = vmatprep.subr.mxu0 0.0
        %752 = vmatpush1.msra.mxu0 %v619
        %753 = vmatprep.subr.mxu0 0.0
        %754 = vmatpush1.msra.mxu0 0.0
        %755 = vmatprep.subr.mxu0 0.0
        %756 = vmatpush1.msra.mxu0 0.0
        %757 = vmatprep.subr.mxu0 0.0
        %758 = vmatpush1.msra.mxu0 0.0
        %759 = vmatprep.subr.mxu0 0.0
        %760 = vmatpush1.msra.mxu0 0.0
        %761 = vmatprep.subr.mxu0 0.0
        %762 = vmatpush1.msra.mxu0 0.0
        %763 = vmatprep.subr.mxu0 0.0
        %764 = vmatpush1.msra.mxu0 0.0
        %765 = vmatprep.subr.mxu0 0.0
        %766 = vmatpush1.msra.mxu0 0.0
        %767 = vmatprep.subr.mxu0 0.0
        %768 = vmatpush1.msra.mxu0 0.0
        %769 = vmatprep.subr.mxu0 0.0
        %770 = vmatpush1.msra.mxu0 0.0
        %771 = vmatprep.subr.mxu0 0.0
        %772 = vmatpush1.msra.mxu0 0.0
        %773 = vmatprep.subr.mxu0 0.0
        %774 = vmatpush1.msra.mxu0 0.0
        %775 = vmatprep.subr.mxu0 0.0
        %776 = vmatpush1.msra.mxu0 0.0
        %777 = vmatprep.subr.mxu0 0.0
        %778 = vmatpush1.msra.mxu0 0.0
        %779 = vmatprep.subr.mxu0 0.0
        %780 = vmatpush1.msra.mxu0 0.0
        %781 = vmatprep.subr.mxu0 0.0
        %782 = vmatpush1.msra.mxu0 0.0
        %783 = vmatprep.subr.mxu0 0.0
        %784 = vmatpush1.msra.mxu0 0.0
        %785 = vmatprep.mubr.f32.mxu0 0.0
        %786 = vmatmul.mubr.f32.gmra.mrb[0].mxu0 %v487
        %v787 = vpop.f32.mrb[0].mxu0
        %v788 = vadd.f32 %v703, %v787
        %v789 = vpop.f32.mrb[0].mxu0
        %790 = vmatprep.mubr.f32.mxu0 0.0
        %791 = vmatmul.mubr.f32.gmra.mrb[0].mxu0 %v488
        %v792 = vpop.f32.mrb[0].mxu0
        %v793 = vadd.f32 %v708, %v792
        %v794 = vpop.f32.mrb[0].mxu0
        %795 = vmatprep.mubr.f32.mxu0 0.0
        %796 = vmatmul.mubr.f32.gmra.mrb[0].mxu0 %v489
        %v797 = vpop.f32.mrb[0].mxu0
        %v798 = vadd.f32 %v713, %v797
        %v799 = vpop.f32.mrb[0].mxu0
        %800 = vmatprep.mubr.f32.mxu0 0.0
        %801 = vmatmul.mubr.f32.gmra.mrb[0].mxu0 %v490
        %v802 = vpop.f32.mrb[0].mxu0
        %v803 = vadd.f32 %v718, %v802
        %v804 = vpop.f32.mrb[0].mxu0
        %805 = vdwg.mxu0
        %v806 = vld [vmem:[%s6] sm:$0x1]
        %v808 = vlaneseq
        %v809 = vshrl.u32 %v808, 7
        %v810 = vsub.s32 0, %v809
        %v811 = vrot.slane %v806, %v810
        %v813 = vadd.f32 %v788, %v811
        %v814 = vadd.f32 %v793, %v811
        %v815 = vadd.f32 %v798, %v811
        %v816 = vadd.f32 %v803, %v811
        %v817 = vld [vmem:[%s363] sm:$0xff]
        %v818 = vld [vmem:[%s363 + $0x8] sm:$0xff]
        %v819 = vld [vmem:[%s363 + $0x10] sm:$0xff]
        %v820 = vld [vmem:[%s363 + $0x18] sm:$0xff]
        %v821 = vld [vmem:[#allocation2] sm:$0xff]
        %v822 = vld [vmem:[#allocation2 + $0x8] sm:$0xff]
        %v823 = vld [vmem:[#allocation2 + $0x10] sm:$0xff]
        %v824 = vld [vmem:[#allocation2 + $0x18] sm:$0xff]
        %v826 = vsel %vm381, %v817, 0
        %v829 = vsel %vm381, %v818, 0
        %v832 = vsel %vm381, %v819, 0
        %v835 = vsel %vm381, %v820, 0
        %837 = vmatprep.subr.mxu0 0.0
        %838 = vmatpush1.msra.mxu0 %v821
        %839 = vmatprep.subr.mxu0 0.0
        %840 = vmatpush1.msra.mxu0 %v822
        %841 = vmatprep.subr.mxu0 0.0
        %842 = vmatpush1.msra.mxu0 %v823
        %843 = vmatprep.subr.mxu0 0.0
        %844 = vmatpush1.msra.mxu0 %v824
        %845 = vmatprep.subr.mxu0 0.0
        %846 = vmatpush1.msra.mxu0 0.0
        %847 = vmatprep.subr.mxu0 0.0
        %848 = vmatpush1.msra.mxu0 0.0
        %849 = vmatprep.subr.mxu0 0.0
        %850 = vmatpush1.msra.mxu0 0.0
        %851 = vmatprep.subr.mxu0 0.0
        %852 = vmatpush1.msra.mxu0 0.0
        %853 = vmatprep.subr.mxu0 0.0
        %854 = vmatpush1.msra.mxu0 0.0
        %855 = vmatprep.subr.mxu0 0.0
        %856 = vmatpush1.msra.mxu0 0.0
        %857 = vmatprep.subr.mxu0 0.0
        %858 = vmatpush1.msra.mxu0 0.0
        %859 = vmatprep.subr.mxu0 0.0
        %860 = vmatpush1.msra.mxu0 0.0
        %861 = vmatprep.subr.mxu0 0.0
        %862 = vmatpush1.msra.mxu0 0.0
        %863 = vmatprep.subr.mxu0 0.0
        %864 = vmatpush1.msra.mxu0 0.0
        %865 = vmatprep.subr.mxu0 0.0
        %866 = vmatpush1.msra.mxu0 0.0
        %867 = vmatprep.subr.mxu0 0.0
        %868 = vmatpush1.msra.mxu0 0.0
        %869 = vmatprep.subr.mxu0 0.0
        %870 = vmatpush1.msra.mxu0 0.0
        %871 = vmatprep.subr.mxu0 0.0
        %872 = vmatpush1.msra.mxu0 0.0
        %873 = vmatprep.subr.mxu0 0.0
        %874 = vmatpush1.msra.mxu0 0.0
        %875 = vmatprep.subr.mxu0 0.0
        %876 = vmatpush1.msra.mxu0 0.0
        %877 = vmatprep.subr.mxu0 0.0
        %878 = vmatpush1.msra.mxu0 0.0
        %879 = vmatprep.subr.mxu0 0.0
        %880 = vmatpush1.msra.mxu0 0.0
        %881 = vmatprep.subr.mxu0 0.0
        %882 = vmatpush1.msra.mxu0 0.0
        %883 = vmatprep.subr.mxu0 0.0
        %884 = vmatpush1.msra.mxu0 0.0
        %885 = vmatprep.subr.mxu0 0.0
        %886 = vmatpush1.msra.mxu0 0.0
        %887 = vmatprep.subr.mxu0 0.0
        %888 = vmatpush1.msra.mxu0 0.0
        %889 = vmatprep.subr.mxu0 0.0
        %890 = vmatpush1.msra.mxu0 0.0
        %891 = vmatprep.subr.mxu0 0.0
        %892 = vmatpush1.msra.mxu0 0.0
        %893 = vmatprep.subr.mxu0 0.0
        %894 = vmatpush1.msra.mxu0 0.0
        %895 = vmatprep.subr.mxu0 0.0
        %896 = vmatpush1.msra.mxu0 0.0
        %897 = vmatprep.subr.mxu0 0.0
        %898 = vmatpush1.msra.mxu0 0.0
        %899 = vmatprep.subr.mxu0 0.0
        %900 = vmatpush1.msra.mxu0 0.0
        %901 = vmatprep.mubr.f32.mxu0 0.0
        %902 = vmatmul.mubr.f32.gmra.mrb[0].mxu0 %v826
        %v903 = vpop.f32.mrb[0].mxu0
        %v904 = vadd.f32 %v813, %v903
        %v905 = vpop.f32.mrb[0].mxu0
        %906 = vmatprep.mubr.f32.mxu0 0.0
        %907 = vmatmul.mubr.f32.gmra.mrb[0].mxu0 %v829
        %v908 = vpop.f32.mrb[0].mxu0
        %v909 = vadd.f32 %v814, %v908
        %v910 = vpop.f32.mrb[0].mxu0
        %911 = vmatprep.mubr.f32.mxu0 0.0
        %912 = vmatmul.mubr.f32.gmra.mrb[0].mxu0 %v832
        %v913 = vpop.f32.mrb[0].mxu0
        %v914 = vadd.f32 %v815, %v913
        %v915 = vpop.f32.mrb[0].mxu0
        %916 = vmatprep.mubr.f32.mxu0 0.0
        %917 = vmatmul.mubr.f32.gmra.mrb[0].mxu0 %v835
        %v918 = vpop.f32.mrb[0].mxu0
        %v919 = vadd.f32 %v816, %v918
        %v920 = vpop.f32.mrb[0].mxu0
        %921 = vdwg.mxu0
        %922 = vst [vmem:[%s346] sm:$0xff] %v904
        %923 = vst [vmem:[%s346 + $0x8] sm:$0xff] %v909
        %924 = vst [vmem:[%s346 + $0x10] sm:$0xff] %v914
        %925 = vst [vmem:[%s346 + $0x18] sm:$0xff] %v919
        %s926 = sand.u32 %s214, 1
        %s927 = scalar_lea.sflag [#allocation4], %s926
        %s928 = sand.u32 %s214, 1
        %s929 = smul.addr %s928, 32
        %s930 = scalar_lea.vmem [#allocation5], %s929
        // Predicated region
        $region57: #{tpu_custom_call.1} parent=51 // pred_check
          %p931 = pneg %p224
        $region58: #{tpu_custom_call.1} parent=51 // pred_check_branch
          %933 = sbr.rel (%p931) target = $region60
        $region59: #{tpu_custom_call.1} parent=51 // pred_region
          %s934 = smul.u32 4, %s23
          %s936 = ssub.s32 512, 512
          %937 = vsyncadd %s927, %s936
          %s938 = smul.addr %s934, 128
          %s939 = scalar_lea.hbm %s8, %s938
          %s940 = sshll.u32 %s930, 4
          %s941 = int_to_ptr.vmem [resolvable:$true] %s940
          %946 = dma.vmem_to_hbm [thread:$0]  %s941, 512, %s939, %s927, 128, 128, 8
        $region60: #{tpu_custom_call.1} parent=51 // pred_fallthru
          _
      $region52: #{tpu_custom_call.1} parent=5 // pred_fallthru
        _
      %p947 = scmp.le.s32.totalorder 2, %s18
      // Predicated region
      $region61: #{tpu_custom_call.1} parent=5 // pred_check
        %p948 = pneg %p947
      $region62: #{tpu_custom_call.1} parent=5 // pred_check_branch
        %950 = sbr.rel (%p948) target = $region64
      $region63: #{tpu_custom_call.1} parent=5 // pred_region
        %s951 = ssub.s32 %s18, 2
        // Predicated region
        $region65: #{tpu_custom_call.1} parent=63 // pred_check
          %p952 = pneg %p230
        $region66: #{tpu_custom_call.1} parent=63 // pred_check_branch
          %954 = sbr.rel (%p952) target = $region68
        $region67: #{tpu_custom_call.1} parent=63 // pred_region
          %s955 = sand.u32 %s215, 1
          %s956 = scalar_lea.sflag [#allocation4], %s955
          %s957 = sand.u32 %s215, 1
          %s958 = smul.addr %s957, 32
          %s959 = scalar_lea.vmem [#allocation5], %s958
          %960 = dma.done %s956, 512
        $region68: #{tpu_custom_call.1} parent=63 // pred_fallthru
          _
      $region64: #{tpu_custom_call.1} parent=5 // pred_fallthru
        _
    $region6: #{tpu_custom_call.1} parent=1 // loop_footer
      %s22 = sadd.s32 1, %s18
    $region7: #{tpu_custom_call.1} parent=1 // loop_footer_branch
      %17 = sbr.rel target = $region3
    $region8: #{tpu_custom_call.1} parent=1 // loop_exit
      _
    %961 = vsyncpa [#allocation3], 1
    %s962 = scalar_lea.sflag [#allocation3], 1
    %963 = vsyncpa %s962, 1
    %964 = vsyncpa [#allocation4], 1
    %s965 = scalar_lea.sflag [#allocation4], 1
    %966 = vsyncpa %s965, 1

</llo_original>
